<compile_context>
chip_gen: v6e
topology: v6e:2x2x1
jax: 0.10.0
libtpu: 0.0.40
codegen_flags: <defaults>
</compile_context>

<pallas_src>
import jax
import jax.numpy as jnp
import numpy as np
from jax.experimental import pallas as pl
from jax.experimental.pallas import tpu as pltpu


# ------------------------------ Fused forward kernel --------------------------------
def _textual_fused_kernel(cn_ref, x_ref, t_ref, wg_ref, bg_ref,
                          wc_ref, bc_ref, wfc_ref, bfc_ref,
                          tok_out_ref, seg_out_ref):
    TB, L, D = x_ref.shape
    Db = t_ref.shape[-1]
    R = TB * L

    x = x_ref[...].reshape(R, D)                                 # f32
    t = t_ref[...].reshape(R, Db)                                # f32

    # ---- Gate fusion: two dots on static weight-slab slices (no lane concat) -------
    #   pre = [x | t] @ [[wxx,wxx1],[wyy,wyy1]] + (bxx+byy | bxx1+byy1)
    pre = (jnp.dot(x.astype(jnp.bfloat16), wg_ref[:D, :],
                   preferred_element_type=jnp.float32)
           + jnp.dot(t.astype(jnp.bfloat16), wg_ref[D:, :],
                     preferred_element_type=jnp.float32)
           + bg_ref[...])
    gate = jax.nn.sigmoid(pre[:, :D])                            # f32 VPU/EUP math
    new_info = jnp.tanh(pre[:, D:])
    seg_tok = x + gate * new_info                                # (R, D) f32
    tok_out_ref[...] = seg_tok.reshape(TB, L, D).astype(tok_out_ref.dtype)

    # ---- Char-axis conv (k=3, 'same', per-segment zero padding) + ReLU -------------
    # One fused (R, D) @ (D, 3D) matmul; the +/-1 char shifts are applied to the
    # matmul OUTPUT columns with pltpu.roll (XLU) + boundary masks.
    y = jnp.dot(seg_tok.astype(jnp.bfloat16), wc_ref[...],
                preferred_element_type=jnp.float32)              # (R, 3D)

    pos = jax.lax.broadcasted_iota(jnp.int32, (TB, L, D), 1)     # char index (no modulo)
    charpos = pos.reshape(R, D)

    y_prev = pltpu.roll(y[:, :D], shift=1, axis=0)               # tap from char-1
    y_next = pltpu.roll(y[:, 2 * D:], shift=R - 1, axis=0)       # tap from char+1
    conv = (jnp.where(charpos == 0, 0.0, y_prev)
            + y[:, D:2 * D]
            + jnp.where(charpos == L - 1, 0.0, y_next)
            + bc_ref[...])
    conv = jnp.maximum(conv, 0.0).reshape(TB, L, D)

    # ---- char_nums-masked max pool over chars (conv >= 0 post-ReLU, so 0 is benign;
    #      segments with char_nums == 0 pool to 0 — see correctness note) ------------
    cn = cn_ref[...]                                             # (TB, 1, 1) int32
    pooled = jnp.max(jnp.where(pos < cn, conv, 0.0), axis=1)     # (TB, D)

    # ---- FC + ReLU, lane/sublane-dense (TB, Dout_pad) store --------------------------
    out = (jnp.dot(pooled.astype(jnp.bfloat16), wfc_ref[...],
                   preferred_element_type=jnp.float32) + bfc_ref[...])
    seg_out_ref[...] = jnp.maximum(out, 0.0).astype(seg_out_ref.dtype)


# ------------------------------- VMEM budget helper ----------------------------------
def _vmem_limit_bytes(TB, L, D, Db, Dout_pad):
    f32, b16 = 4, 2
    R = TB * L
    # double-buffered I/O tiles
    tiles = 2 * (TB * L * D * f32 + TB * L * Db * f32 + TB * 4
                 + TB * L * D * f32 + TB * Dout_pad * f32)
    # weights/biases (double-buffered by default pipelining)
    weights = 2 * ((D + Db) * 2 * D * b16 + 2 * D * f32
                   + D * 3 * D * b16 + D * f32
                   + D * Dout_pad * b16 + Dout_pad * f32)
    # live f32 intermediates: pre (R,2D), y (R,3D), seg_tok/conv/masks (~4D worth)
    interm = R * (2 * D + 3 * D + 4 * D) * f32
    est = tiles + weights + interm
    return int(min(max(2 * est, 16 << 20), 40 << 20))


# --------------------------------- Module forward ------------------------------------
def textual_embedding_forward(recog_hidden_list, token_bert, char_nums, params, tb=64):
    # recog_hidden = torch.stack(recog_hidden, 0)
    recog_hidden = jnp.stack(recog_hidden_list, axis=0)          # (B, N, L, D)
    B, N, L, D = recog_hidden.shape
    Db = token_bert.shape[-1]
    BN = B * N

    g = params["gate"]
    s = params["sent"]
    Dout = s["wfc"].shape[1]
    Dout_pad = max(128, ((Dout + 127) // 128) * 128)

    # Fuse the 4 gate Linear layers: W = [[wxx, wxx1], [wyy, wyy1]]  (D+Db, 2D),
    # biases pre-summed (bxx+byy, bxx1+byy1)  (1, 2D).  Weights cast to bf16 on host.
    wg = jnp.concatenate(
        [jnp.concatenate([g["wxx"], g["wxx1"]], axis=1),
         jnp.concatenate([g["wyy"], g["wyy1"]], axis=1)], axis=0).astype(jnp.bfloat16)
    bg = jnp.concatenate([g["bxx"] + g["byy"], g["bxx1"] + g["byy1"]], axis=1)

    # Fuse the 3 conv taps into one (D, 3D) weight slab, bf16.
    wc = jnp.concatenate([s["w0"], s["w1"], s["w2"]], axis=1).astype(jnp.bfloat16)
    bc = s["bc"]

    # FC, padded on the lane axis to a multiple of 128 for unmasked stores.
    wfc = s["wfc"]
    bfc = s["bfc"]
    if Dout_pad != Dout:
        wfc = jnp.pad(wfc, ((0, 0), (0, Dout_pad - Dout)))
        bfc = jnp.pad(bfc, ((0, 0), (0, Dout_pad - Dout)))
    wfc = wfc.astype(jnp.bfloat16)

    x = recog_hidden.reshape(BN, L, D)
    t = token_bert.reshape(BN, L, Db)
    cn = char_nums.reshape(BN, 1, 1).astype(jnp.int32)

    # Segments per grid step: multiple of 8, aiming for R = TB*L >= 512 matmul rows,
    # clamped to the (rounded-up) segment count so small problems use a single step.
    tb_eff = max(tb, ((pl.cdiv(512, L) + 7) // 8) * 8)
    TB = min(tb_eff, ((BN + 7) // 8) * 8)
    TB = max(8, (TB // 8) * 8)
    BN_pad = pl.cdiv(BN, TB) * TB
    if BN_pad != BN:
        pad = BN_pad - BN
        x = jnp.pad(x, ((0, pad), (0, 0), (0, 0)))
        t = jnp.pad(t, ((0, pad), (0, 0), (0, 0)))
        cn = jnp.pad(cn, ((0, pad), (0, 0), (0, 0)))   # padded segments: char_nums = 0

    seg_blk = lambda i: (i, 0, 0)
    full2 = lambda i: (0, 0)

    tok_out, seg_out = pl.pallas_call(
        _textual_fused_kernel,
        out_shape=(jax.ShapeDtypeStruct((BN_pad, L, D), jnp.float32),
                   jax.ShapeDtypeStruct((BN_pad, Dout_pad), jnp.float32)),
        grid_spec=pltpu.PrefetchScalarGridSpec(
            num_scalar_prefetch=0,
            grid=(BN_pad // TB,),
            in_specs=[
                pl.BlockSpec((TB, 1, 1), seg_blk),               # char_nums
                pl.BlockSpec((TB, L, D), seg_blk),               # recog hidden
                pl.BlockSpec((TB, L, Db), seg_blk),              # bert token embedding
                pl.BlockSpec((D + Db, 2 * D), full2),            # fused gate weight (bf16)
                pl.BlockSpec((1, 2 * D), full2),                 # fused gate bias (f32)
                pl.BlockSpec((D, 3 * D), full2),                 # fused conv weight (bf16)
                pl.BlockSpec((1, D), full2),                     # conv bias (f32)
                pl.BlockSpec((D, Dout_pad), full2),              # FC weight (bf16)
                pl.BlockSpec((1, Dout_pad), full2),              # FC bias (f32)
            ],
            out_specs=(pl.BlockSpec((TB, L, D), seg_blk),
                       pl.BlockSpec((TB, Dout_pad), lambda i: (i, 0))),
        ),
        compiler_params=pltpu.CompilerParams(
            dimension_semantics=("parallel",),
            vmem_limit_bytes=_vmem_limit_bytes(TB, L, D, Db, Dout_pad)),
    )(cn, x, t, wg, bg, wc, bc, wfc, bfc)

    segment_emb_tok = tok_out[:BN].reshape(B, N, L, D)
    segment_emb = seg_out[:BN, :Dout].reshape(B, N, Dout)
    # self.dropout(segment_emb): identity in eval mode
    return segment_emb, segment_emb_tok


# -------------------------------- Pure-JAX reference ---------------------------------
def reference_forward(recog_hidden_list, token_bert, char_nums, params):
    rh = jnp.stack(recog_hidden_list, axis=0)
    B, N, L, D = rh.shape
    Db = token_bert.shape[-1]
    g = params["gate"]
    x = rh.reshape(-1, D)
    t = token_bert.reshape(-1, Db)
    gate = jax.nn.sigmoid(x @ g["wxx"] + g["bxx"] + t @ g["wyy"] + g["byy"])
    new_info = jnp.tanh(x @ g["wxx1"] + g["bxx1"] + t @ g["wyy1"] + g["byy1"])
    seg_tok = (x + gate * new_info).reshape(B, N, L, D)

    s = params["sent"]
    xs = seg_tok.reshape(B * N, L, D)
    zero = jnp.zeros((B * N, 1, D), xs.dtype)
    x_prev = jnp.concatenate([zero, xs[:, :-1]], axis=1)
    x_next = jnp.concatenate([xs[:, 1:], zero], axis=1)
    conv = (jnp.einsum("bld,de->ble", x_prev, s["w0"])
            + jnp.einsum("bld,de->ble", xs, s["w1"])
            + jnp.einsum("bld,de->ble", x_next, s["w2"]) + s["bc"][None])
    conv = jnp.maximum(conv, 0.0)
    cn = char_nums.reshape(-1)
    pos = jnp.arange(L)[None, :, None]
    # mask with 0: identical to -inf masking since conv >= 0 and char_nums >= 1
    masked = jnp.where(pos < cn[:, None, None], conv, 0.0)
    pooled = jnp.max(masked, axis=1)
    out = jnp.maximum(pooled @ s["wfc"] + s["bfc"], 0.0)
    return out.reshape(B, N, -1), seg_tok


# ------------------------------------ Params -----------------------------------------
def init_params(key, D, Db, Dout):
    ks = jax.random.split(key, 14)
    s = 0.05
    gate = dict(
        wxx=s * jax.random.normal(ks[0], (D, D), jnp.float32),
        bxx=s * jax.random.normal(ks[1], (1, D), jnp.float32),
        wyy=s * jax.random.normal(ks[2], (Db, D), jnp.float32),
        byy=s * jax.random.normal(ks[3], (1, D), jnp.float32),
        wxx1=s * jax.random.normal(ks[4], (D, D), jnp.float32),
        bxx1=s * jax.random.normal(ks[5], (1, D), jnp.float32),
        wyy1=s * jax.random.normal(ks[6], (Db, D), jnp.float32),
        byy1=s * jax.random.normal(ks[7], (1, D), jnp.float32),
    )
    sent = dict(
        w0=s * jax.random.normal(ks[8], (D, D), jnp.float32),
        w1=s * jax.random.normal(ks[9], (D, D), jnp.float32),
        w2=s * jax.random.normal(ks[10], (D, D), jnp.float32),
        bc=s * jax.random.normal(ks[11], (1, D), jnp.float32),
        wfc=s * jax.random.normal(ks[12], (D, Dout), jnp.float32),
        bfc=s * jax.random.normal(ks[13], (1, Dout), jnp.float32),
    )
    return dict(gate=gate, sent=sent)


if __name__ == "__main__":
    # batch, boxes, chars, dims — small demo: BN=16 segments -> single grid step, TB=16
    B, N, L, D, Db = 2, 8, 8, 128, 128
    key = jax.random.PRNGKey(0)
    k_rh, k_bert, k_cn, k_p = jax.random.split(key, 4)

    rh_all = jax.random.normal(k_rh, (B, N, L, D), jnp.float32)
    recog_hidden_list = [rh_all[b] for b in range(B)]            # list of (N, L, D)
    token_bert = jax.random.normal(k_bert, (B, N, L, Db), jnp.float32)
    char_nums = jax.random.randint(k_cn, (B, N), 1, L + 1).astype(jnp.int32)
    params = init_params(k_p, D, Db, D)

    seg_emb, tok_emb = textual_embedding_forward(
        recog_hidden_list, token_bert, char_nums, params)
    seg_emb = jax.block_until_ready(seg_emb)
    tok_emb = jax.block_until_ready(tok_emb)

    seg_ref, tok_ref = reference_forward(
        recog_hidden_list, token_bert, char_nums, params)
    # bf16 matmul operands (f32 accumulation) -> compare at 2e-2 against the f32 ref.
    np.testing.assert_allclose(np.asarray(tok_emb), np.asarray(tok_ref),
                               rtol=2e-2, atol=2e-2)
    np.testing.assert_allclose(np.asarray(seg_emb), np.asarray(seg_ref),
                               rtol=2e-2, atol=2e-2)
    assert seg_emb.shape == (B, N, D) and tok_emb.shape == (B, N, L, D)
    print("KERNEL_OK")
</pallas_src>

<mosaic_0001>
module attributes {stable_mosaic.version = 11 : i64} {
  func.func @_textual_fused_kernel(%arg0: i32, %arg1: memref<16x1x1xi32, #tpu.memory_space<vmem>>, %arg2: memref<16x8x128xf32, #tpu.memory_space<vmem>>, %arg3: memref<16x8x128xf32, #tpu.memory_space<vmem>>, %arg4: memref<256x256xbf16, #tpu.memory_space<vmem>>, %arg5: memref<1x256xf32, #tpu.memory_space<vmem>>, %arg6: memref<128x384xbf16, #tpu.memory_space<vmem>>, %arg7: memref<1x128xf32, #tpu.memory_space<vmem>>, %arg8: memref<128x128xbf16, #tpu.memory_space<vmem>>, %arg9: memref<1x128xf32, #tpu.memory_space<vmem>>, %arg10: memref<16x8x128xf32, #tpu.memory_space<vmem>>, %arg11: memref<16x128xf32, #tpu.memory_space<vmem>>) attributes {dimension_semantics = [#tpu.dimension_semantics<parallel>], iteration_bounds = array<i64: 1>, scalar_prefetch = 0 : i64, scratch_operands = 0 : i64, tpu.core_type = #tpu.core_type<tc>, window_params = [{transform_indices = @transform_0, window_bounds = array<i64: 16, 1, 1>}, {transform_indices = @transform_1, window_bounds = array<i64: 16, 8, 128>}, {transform_indices = @transform_2, window_bounds = array<i64: 16, 8, 128>}, {pipeline_mode = #tpu.pipeline_mode<synchronous>, transform_indices = @transform_3, window_bounds = array<i64: 256, 256>}, {pipeline_mode = #tpu.pipeline_mode<synchronous>, transform_indices = @transform_4, window_bounds = array<i64: 1, 256>}, {pipeline_mode = #tpu.pipeline_mode<synchronous>, transform_indices = @transform_5, window_bounds = array<i64: 128, 384>}, {pipeline_mode = #tpu.pipeline_mode<synchronous>, transform_indices = @transform_6, window_bounds = array<i64: 1, 128>}, {pipeline_mode = #tpu.pipeline_mode<synchronous>, transform_indices = @transform_7, window_bounds = array<i64: 128, 128>}, {pipeline_mode = #tpu.pipeline_mode<synchronous>, transform_indices = @transform_8, window_bounds = array<i64: 1, 128>}, {transform_indices = @transform_9, window_bounds = array<i64: 16, 8, 128>}, {transform_indices = @transform_10, window_bounds = array<i64: 16, 128>}]} {
    %c0 = arith.constant 0 : index
    %c0_0 = arith.constant 0 : index
    %c0_1 = arith.constant 0 : index
    %0 = vector.load %arg2[%c0, %c0_0, %c0_1] : memref<16x8x128xf32, #tpu.memory_space<vmem>>, vector<16x8x128xf32>
    %1 = vector.shape_cast %0 : vector<16x8x128xf32> to vector<128x128xf32>
    %c0_2 = arith.constant 0 : index
    %c0_3 = arith.constant 0 : index
    %c0_4 = arith.constant 0 : index
    %2 = vector.load %arg3[%c0_2, %c0_3, %c0_4] : memref<16x8x128xf32, #tpu.memory_space<vmem>>, vector<16x8x128xf32>
    %3 = vector.shape_cast %2 : vector<16x8x128xf32> to vector<128x128xf32>
    %4 = arith.truncf %1 : vector<128x128xf32> to vector<128x128xbf16>
    %c0_5 = arith.constant 0 : index
    %c0_6 = arith.constant 0 : index
    %5 = vector.load %arg4[%c0_5, %c0_6] : memref<256x256xbf16, #tpu.memory_space<vmem>>, vector<128x256xbf16>
    %cst = arith.constant dense<0.000000e+00> : vector<128x256xf32>
    %6 = tpu.matmul %4, %5, %cst {dimension_numbers = #tpu.dot_dimension_numbers<[1], [0], [0], [1], [0, 0, 1, 1], [], []>} : vector<128x128xbf16>, vector<128x256xbf16>, vector<128x256xf32> -> vector<128x256xf32>
    %7 = arith.truncf %3 : vector<128x128xf32> to vector<128x128xbf16>
    %c128 = arith.constant 128 : index
    %c0_7 = arith.constant 0 : index
    %8 = vector.load %arg4[%c128, %c0_7] : memref<256x256xbf16, #tpu.memory_space<vmem>>, vector<128x256xbf16>
    %cst_8 = arith.constant dense<0.000000e+00> : vector<128x256xf32>
    %9 = tpu.matmul %7, %8, %cst_8 {dimension_numbers = #tpu.dot_dimension_numbers<[1], [0], [0], [1], [0, 0, 1, 1], [], []>} : vector<128x128xbf16>, vector<128x256xbf16>, vector<128x256xf32> -> vector<128x256xf32>
    %10 = arith.addf %6, %9 : vector<128x256xf32>
    %c0_9 = arith.constant 0 : index
    %c0_10 = arith.constant 0 : index
    %11 = vector.load %arg5[%c0_9, %c0_10] : memref<1x256xf32, #tpu.memory_space<vmem>>, vector<1x256xf32>
    %12 = vector.broadcast %11 : vector<1x256xf32> to vector<128x256xf32>
    %13 = arith.addf %10, %12 : vector<128x256xf32>
    %14 = vector.extract_strided_slice %13 {offsets = [0, 0], sizes = [128, 128], strides = [1, 1]} : vector<128x256xf32> to vector<128x128xf32>
    %15 = arith.negf %14 : vector<128x128xf32>
    %16 = math.exp %15 : vector<128x128xf32>
    %cst_11 = arith.constant 1.000000e+00 : f32
    %17 = vector.broadcast %cst_11 : f32 to vector<128x128xf32>
    %18 = arith.addf %17, %16 : vector<128x128xf32>
    %19 = arith.divf %17, %18 : vector<128x128xf32>
    %20 = vector.extract_strided_slice %13 {offsets = [0, 128], sizes = [128, 128], strides = [1, 1]} : vector<128x256xf32> to vector<128x128xf32>
    %21 = math.tanh %20 : vector<128x128xf32>
    %22 = arith.mulf %19, %21 : vector<128x128xf32>
    %23 = arith.addf %1, %22 : vector<128x128xf32>
    %24 = vector.shape_cast %23 : vector<128x128xf32> to vector<16x8x128xf32>
    %c0_12 = arith.constant 0 : index
    %c0_13 = arith.constant 0 : index
    %c0_14 = arith.constant 0 : index
    %25 = vector.load %arg10[%c0_12, %c0_13, %c0_14] : memref<16x8x128xf32, #tpu.memory_space<vmem>>, vector<16x8x128xf32>
    tpu.vector_store %arg10[%c0_12, %c0_13, %c0_14], %24 {strides = array<i32>} : memref<16x8x128xf32, #tpu.memory_space<vmem>>, vector<16x8x128xf32>,
    %26 = arith.truncf %23 : vector<128x128xf32> to vector<128x128xbf16>
    %c0_15 = arith.constant 0 : index
    %c0_16 = arith.constant 0 : index
    %27 = vector.load %arg6[%c0_15, %c0_16] : memref<128x384xbf16, #tpu.memory_space<vmem>>, vector<128x384xbf16>
    %cst_17 = arith.constant dense<0.000000e+00> : vector<128x384xf32>
    %28 = tpu.matmul %26, %27, %cst_17 {dimension_numbers = #tpu.dot_dimension_numbers<[1], [0], [0], [1], [0, 0, 1, 1], [], []>} : vector<128x128xbf16>, vector<128x384xbf16>, vector<128x384xf32> -> vector<128x384xf32>
    %29 = tpu.iota {dimensions = array<i32: 1>} : vector<16x8x128xi32>
    %30 = vector.shape_cast %29 : vector<16x8x128xi32> to vector<128x128xi32>
    %31 = vector.extract_strided_slice %28 {offsets = [0, 0], sizes = [128, 128], strides = [1, 1]} : vector<128x384xf32> to vector<128x128xf32>
    %c1_i32 = arith.constant 1 : i32
    %32 = tpu.dynamic_rotate %31 by %c1_i32 dim 0 : vector<128x128xf32>, i32 -> vector<128x128xf32>
    %33 = vector.extract_strided_slice %28 {offsets = [0, 256], sizes = [128, 128], strides = [1, 1]} : vector<128x384xf32> to vector<128x128xf32>
    %c127_i32 = arith.constant 127 : i32
    %34 = tpu.dynamic_rotate %33 by %c127_i32 dim 0 : vector<128x128xf32>, i32 -> vector<128x128xf32>
    %c0_i32 = arith.constant 0 : i32
    %35 = vector.broadcast %c0_i32 : i32 to vector<128x128xi32>
    %36 = arith.cmpi eq, %30, %35 : vector<128x128xi32>
    %cst_18 = arith.constant 0.000000e+00 : f32
    %37 = vector.broadcast %cst_18 : f32 to vector<128x128xf32>
    %38 = arith.select %36, %37, %32 : vector<128x128xi1>, vector<128x128xf32>
    %39 = vector.extract_strided_slice %28 {offsets = [0, 128], sizes = [128, 128], strides = [1, 1]} : vector<128x384xf32> to vector<128x128xf32>
    %40 = arith.addf %38, %39 : vector<128x128xf32>
    %c7_i32 = arith.constant 7 : i32
    %41 = vector.broadcast %c7_i32 : i32 to vector<128x128xi32>
    %42 = arith.cmpi eq, %30, %41 : vector<128x128xi32>
    %cst_19 = arith.constant 0.000000e+00 : f32
    %43 = vector.broadcast %cst_19 : f32 to vector<128x128xf32>
    %44 = arith.select %42, %43, %34 : vector<128x128xi1>, vector<128x128xf32>
    %45 = arith.addf %40, %44 : vector<128x128xf32>
    %c0_20 = arith.constant 0 : index
    %c0_21 = arith.constant 0 : index
    %46 = vector.load %arg7[%c0_20, %c0_21] : memref<1x128xf32, #tpu.memory_space<vmem>>, vector<1x128xf32>
    %47 = vector.broadcast %46 : vector<1x128xf32> to vector<128x128xf32>
    %48 = arith.addf %45, %47 : vector<128x128xf32>
    %cst_22 = arith.constant 0.000000e+00 : f32
    %49 = vector.broadcast %cst_22 : f32 to vector<128x128xf32>
    %50 = arith.maximumf %48, %49 : vector<128x128xf32>
    %51 = vector.shape_cast %50 : vector<128x128xf32> to vector<16x8x128xf32>
    %c0_23 = arith.constant 0 : index
    %c0_24 = arith.constant 0 : index
    %c0_25 = arith.constant 0 : index
    %52 = vector.load %arg1[%c0_23, %c0_24, %c0_25] : memref<16x1x1xi32, #tpu.memory_space<vmem>>, vector<16x1x1xi32>
    %53 = vector.broadcast %52 : vector<16x1x1xi32> to vector<16x8x128xi32>
    %54 = arith.cmpi slt, %29, %53 : vector<16x8x128xi32>
    %cst_26 = arith.constant 0.000000e+00 : f32
    %55 = vector.broadcast %cst_26 : f32 to vector<16x8x128xf32>
    %56 = arith.select %54, %51, %55 : vector<16x8x128xi1>, vector<16x8x128xf32>
    %cst_27 = arith.constant dense<0xFF800000> : vector<16x128xf32>
    %57 = vector.multi_reduction <maximumf>, %56, %cst_27 [1] : vector<16x8x128xf32> to vector<16x128xf32>
    %58 = arith.truncf %57 : vector<16x128xf32> to vector<16x128xbf16>
    %c0_28 = arith.constant 0 : index
    %c0_29 = arith.constant 0 : index
    %59 = vector.load %arg8[%c0_28, %c0_29] : memref<128x128xbf16, #tpu.memory_space<vmem>>, vector<128x128xbf16>
    %cst_30 = arith.constant dense<0.000000e+00> : vector<16x128xf32>
    %60 = tpu.matmul %58, %59, %cst_30 {dimension_numbers = #tpu.dot_dimension_numbers<[1], [0], [0], [1], [0, 0, 1, 1], [], []>} : vector<16x128xbf16>, vector<128x128xbf16>, vector<16x128xf32> -> vector<16x128xf32>
    %c0_31 = arith.constant 0 : index
    %c0_32 = arith.constant 0 : index
    %61 = vector.load %arg9[%c0_31, %c0_32] : memref<1x128xf32, #tpu.memory_space<vmem>>, vector<1x128xf32>
    %62 = vector.broadcast %61 : vector<1x128xf32> to vector<16x128xf32>
    %63 = arith.addf %60, %62 : vector<16x128xf32>
    %cst_33 = arith.constant 0.000000e+00 : f32
    %64 = vector.broadcast %cst_33 : f32 to vector<16x128xf32>
    %65 = arith.maximumf %63, %64 : vector<16x128xf32>
    %c0_34 = arith.constant 0 : index
    %c0_35 = arith.constant 0 : index
    %66 = vector.load %arg11[%c0_34, %c0_35] : memref<16x128xf32, #tpu.memory_space<vmem>>, vector<16x128xf32>
    tpu.vector_store %arg11[%c0_34, %c0_35], %65 {strides = array<i32>} : memref<16x128xf32, #tpu.memory_space<vmem>>, vector<16x128xf32>,
    return
  }
  func.func @transform_0(%arg0: i32) -> (i32, i32, i32) {
    %c0_i32 = arith.constant 0 : i32
    %c0_i32_0 = arith.constant 0 : i32
    %c0_i32_1 = arith.constant 0 : i32
    return %arg0, %c0_i32, %c0_i32_0 : i32, i32, i32
  }
  func.func @transform_1(%arg0: i32) -> (i32, i32, i32) {
    %c0_i32 = arith.constant 0 : i32
    %c0_i32_0 = arith.constant 0 : i32
    %c0_i32_1 = arith.constant 0 : i32
    return %arg0, %c0_i32, %c0_i32_0 : i32, i32, i32
  }
  func.func @transform_2(%arg0: i32) -> (i32, i32, i32) {
    %c0_i32 = arith.constant 0 : i32
    %c0_i32_0 = arith.constant 0 : i32
    %c0_i32_1 = arith.constant 0 : i32
    return %arg0, %c0_i32, %c0_i32_0 : i32, i32, i32
  }
  func.func @transform_3(%arg0: i32) -> (i32, i32) {
    %c0_i32 = arith.constant 0 : i32
    %c0_i32_0 = arith.constant 0 : i32
    %c0_i32_1 = arith.constant 0 : i32
    return %c0_i32, %c0_i32_0 : i32, i32
  }
  func.func @transform_4(%arg0: i32) -> (i32, i32) {
    %c0_i32 = arith.constant 0 : i32
    %c0_i32_0 = arith.constant 0 : i32
    %c0_i32_1 = arith.constant 0 : i32
    return %c0_i32, %c0_i32_0 : i32, i32
  }
  func.func @transform_5(%arg0: i32) -> (i32, i32) {
    %c0_i32 = arith.constant 0 : i32
    %c0_i32_0 = arith.constant 0 : i32
    %c0_i32_1 = arith.constant 0 : i32
    return %c0_i32, %c0_i32_0 : i32, i32
  }
  func.func @transform_6(%arg0: i32) -> (i32, i32) {
    %c0_i32 = arith.constant 0 : i32
    %c0_i32_0 = arith.constant 0 : i32
    %c0_i32_1 = arith.constant 0 : i32
    return %c0_i32, %c0_i32_0 : i32, i32
  }
  func.func @transform_7(%arg0: i32) -> (i32, i32) {
    %c0_i32 = arith.constant 0 : i32
    %c0_i32_0 = arith.constant 0 : i32
    %c0_i32_1 = arith.constant 0 : i32
    return %c0_i32, %c0_i32_0 : i32, i32
  }
  func.func @transform_8(%arg0: i32) -> (i32, i32) {
    %c0_i32 = arith.constant 0 : i32
    %c0_i32_0 = arith.constant 0 : i32
    %c0_i32_1 = arith.constant 0 : i32
    return %c0_i32, %c0_i32_0 : i32, i32
  }
  func.func @transform_9(%arg0: i32) -> (i32, i32, i32) {
    %c0_i32 = arith.constant 0 : i32
    %c0_i32_0 = arith.constant 0 : i32
    %c0_i32_1 = arith.constant 0 : i32
    return %arg0, %c0_i32, %c0_i32_0 : i32, i32, i32
  }
  func.func @transform_10(%arg0: i32) -> (i32, i32) {
    %c0_i32 = arith.constant 0 : i32
    %c0_i32_0 = arith.constant 0 : i32
    return %arg0, %c0_i32 : i32, i32
  }
}

</mosaic_0001>

<llo_original>
// kernel: tpu_custom_call.1
$region0: #{tpu_custom_call.1}
  #allocation0 [shape = 'u32[]', space=smem, size = 0x4, offset = 0x4, fixed_abs, tag = 'smem constant byte address 0x4 - core index']
  #allocation1 [shape = 'u32[144,128]{1,0:T(1,128)}', space=vmem, size = 0x12000, scoped, tag = 'internal scratch']
  %s0 = inlined_call_operand.vmem [shape: s32[16,1,1], index: 0, kind: input, shape index: {}]
  %s1 = inlined_call_operand.hbm [shape: f32[16,8,128], index: 1, kind: input, shape index: {}]
  %s2 = inlined_call_operand.hbm [shape: f32[16,8,128], index: 2, kind: input, shape index: {}]
  %s3 = inlined_call_operand.hbm [shape: bf16[256,256], index: 3, kind: input, shape index: {}]
  %s4 = inlined_call_operand.vmem [shape: f32[1,256], index: 4, kind: input, shape index: {}]
  %s5 = inlined_call_operand.hbm [shape: bf16[128,384], index: 5, kind: input, shape index: {}]
  %s6 = inlined_call_operand.vmem [shape: f32[1,128], index: 6, kind: input, shape index: {}]
  %s7 = inlined_call_operand.hbm [shape: bf16[128,128], index: 7, kind: input, shape index: {}]
  %s8 = inlined_call_operand.vmem [shape: f32[1,128], index: 8, kind: input, shape index: {}]
  %s9 = inlined_call_operand.hbm [shape: f32[16,8,128], index: 9, kind: output, shape index: {0}]
  %s10 = inlined_call_operand.hbm [shape: f32[16,128], index: 10, kind: output, shape index: {1}]
  %11 = xla_tuple %s9, %s10
  %s12 = sld [smem:[#allocation0]]
  $region74: #{tpu_custom_call.1} parent=0
    _
  %s14 = ssub.s32 1, %s12
  %s15 = scalar_select 0, %s14, %s12
  $region1: #{tpu_custom_call.1} parent=0
    #allocation2 [shape = 'u8[65536]{0}', space=vmem, size = 0x10000, scoped, tag = 'input window, operand 1, single buffered']
    #allocation3 [shape = 's32[1]{0}', space=sflag, size = 0x4, scoped, tag = 'scoped memory for tpu_custom_call.1']
    #allocation4 [shape = 's32[1]{0}', space=sflag, size = 0x4, scoped, tag = 'scoped memory for tpu_custom_call.1']
    #allocation5 [shape = 'u8[65536]{0}', space=vmem, size = 0x10000, scoped, tag = 'input window, operand 2, single buffered']
    #allocation6 [shape = 's32[1]{0}', space=sflag, size = 0x4, scoped, tag = 'scoped memory for tpu_custom_call.1']
    #allocation7 [shape = 'u8[131072]{0}', space=vmem, size = 0x20000, scoped, tag = 'input window, operand 3, single buffered']
    #allocation8 [shape = 'u8[98304]{0}', space=vmem, size = 0x18000, scoped, tag = 'input window, operand 5, single buffered']
    #allocation9 [shape = 's32[1]{0}', space=sflag, size = 0x4, scoped, tag = 'scoped memory for tpu_custom_call.1']
    #allocation10 [shape = 'u8[32768]{0}', space=vmem, size = 0x8000, scoped, tag = 'input window, operand 7, single buffered']
    #allocation11 [shape = 'u8[65536]{0}', space=vmem, size = 0x10000, scoped, tag = 'output window, operand 0, single buffered']
    #allocation12 [shape = 'u8[8192]{0}', space=vmem, size = 0x2000, scoped, tag = 'output window, operand 1, single buffered']
    #allocation13 [shape = 's32[1]{0}', space=sflag, size = 0x4, scoped, tag = 'scoped memory for tpu_custom_call.1']
    %16 = vsyncpa [#allocation3], 0
    %17 = vsyncpa [#allocation6], 0
    %18 = vsyncpa [#allocation9], 0
    %19 = vsyncpa [#allocation4], 0
    %20 = vsyncpa [#allocation13], 0
    // Predicated region
    $region2: #{tpu_custom_call.1} parent=1 // pred_check
      _
    $region3: #{tpu_custom_call.1} parent=1 // pred_check_branch
      %22 = sbr.rel (0) target = $region5
    $region4: #{tpu_custom_call.1} parent=1 // pred_region
      _
    $region5: #{tpu_custom_call.1} parent=1 // pred_fallthru
      _
    // Predicated region
    $region6: #{tpu_custom_call.1} parent=1 // pred_check
      _
    $region7: #{tpu_custom_call.1} parent=1 // pred_check_branch
      %24 = sbr.rel (0) target = $region9
    $region8: #{tpu_custom_call.1} parent=1 // pred_region
      %s26 = ssub.s32 2048, 2048
      %27 = vsyncadd [#allocation3], %s26
      %s28 = sshll.u32 [#allocation2], 4
      %s29 = int_to_ptr.vmem [resolvable:$true] %s28
      %34 = dma.hbm_to_vmem [thread:$0]  %s1, 2048, %s29, [#allocation3], 128, 128, 8
    $region9: #{tpu_custom_call.1} parent=1 // pred_fallthru
      _
    // Predicated region
    $region10: #{tpu_custom_call.1} parent=1 // pred_check
      _
    $region11: #{tpu_custom_call.1} parent=1 // pred_check_branch
      %36 = sbr.rel (0) target = $region13
    $region12: #{tpu_custom_call.1} parent=1 // pred_region
      %s38 = ssub.s32 2048, 2048
      %39 = vsyncadd [#allocation6], %s38
      %s40 = sshll.u32 [#allocation5], 4
      %s41 = int_to_ptr.vmem [resolvable:$true] %s40
      %46 = dma.hbm_to_vmem [thread:$0]  %s2, 2048, %s41, [#allocation6], 128, 128, 8
    $region13: #{tpu_custom_call.1} parent=1 // pred_fallthru
      _
    // Predicated region
    $region14: #{tpu_custom_call.1} parent=1 // pred_check
      _
    $region15: #{tpu_custom_call.1} parent=1 // pred_check_branch
      %48 = sbr.rel (0) target = $region17
    $region16: #{tpu_custom_call.1} parent=1 // pred_region
      %s50 = ssub.s32 4096, 4096
      %51 = vsyncadd [#allocation6], %s50
      %s52 = sshll.u32 [#allocation7], 4
      %s53 = int_to_ptr.vmem [resolvable:$true] %s52
      %58 = dma.hbm_to_vmem [thread:$0]  %s3, 4096, %s53, [#allocation6], 128, 128, 8
    $region17: #{tpu_custom_call.1} parent=1 // pred_fallthru
      _
    // Predicated region
    $region18: #{tpu_custom_call.1} parent=1 // pred_check
      _
    $region19: #{tpu_custom_call.1} parent=1 // pred_check_branch
      %60 = sbr.rel (0) target = $region21
    $region20: #{tpu_custom_call.1} parent=1 // pred_region
      _
    $region21: #{tpu_custom_call.1} parent=1 // pred_fallthru
      _
    // Predicated region
    $region22: #{tpu_custom_call.1} parent=1 // pred_check
      _
    $region23: #{tpu_custom_call.1} parent=1 // pred_check_branch
      %62 = sbr.rel (0) target = $region25
    $region24: #{tpu_custom_call.1} parent=1 // pred_region
      %s64 = ssub.s32 3072, 3072
      %65 = vsyncadd [#allocation9], %s64
      %s66 = sshll.u32 [#allocation8], 4
      %s67 = int_to_ptr.vmem [resolvable:$true] %s66
      %72 = dma.hbm_to_vmem [thread:$0]  %s5, 3072, %s67, [#allocation9], 192, 192, 12
    $region25: #{tpu_custom_call.1} parent=1 // pred_fallthru
      _
    // Predicated region
    $region26: #{tpu_custom_call.1} parent=1 // pred_check
      _
    $region27: #{tpu_custom_call.1} parent=1 // pred_check_branch
      %74 = sbr.rel (0) target = $region29
    $region28: #{tpu_custom_call.1} parent=1 // pred_region
      _
    $region29: #{tpu_custom_call.1} parent=1 // pred_fallthru
      _
    // Predicated region
    $region30: #{tpu_custom_call.1} parent=1 // pred_check
      _
    $region31: #{tpu_custom_call.1} parent=1 // pred_check_branch
      %76 = sbr.rel (0) target = $region33
    $region32: #{tpu_custom_call.1} parent=1 // pred_region
      %s78 = ssub.s32 1024, 1024
      %79 = vsyncadd [#allocation9], %s78
      %s80 = sshll.u32 [#allocation10], 4
      %s81 = int_to_ptr.vmem [resolvable:$true] %s80
      %86 = dma.hbm_to_vmem [thread:$0]  %s7, 1024, %s81, [#allocation9], 64, 64, 4
    $region33: #{tpu_custom_call.1} parent=1 // pred_fallthru
      _
    // Predicated region
    $region34: #{tpu_custom_call.1} parent=1 // pred_check
      _
    $region35: #{tpu_custom_call.1} parent=1 // pred_check_branch
      %88 = sbr.rel (0) target = $region37
    $region36: #{tpu_custom_call.1} parent=1 // pred_region
      _
    $region37: #{tpu_custom_call.1} parent=1 // pred_fallthru
      _
    // Predicated region
    $region38: #{tpu_custom_call.1} parent=1 // pred_check
      _
    $region39: #{tpu_custom_call.1} parent=1 // pred_check_branch
      %90 = sbr.rel (0) target = $region41
    $region40: #{tpu_custom_call.1} parent=1 // pred_region
      %91 = dma.done [#allocation3], 2048
    $region41: #{tpu_custom_call.1} parent=1 // pred_fallthru
      _
    // Predicated region
    $region42: #{tpu_custom_call.1} parent=1 // pred_check
      _
    $region43: #{tpu_custom_call.1} parent=1 // pred_check_branch
      %93 = sbr.rel (0) target = $region45
    $region44: #{tpu_custom_call.1} parent=1 // pred_region
      %94 = dma.done [#allocation6], 2048
    $region45: #{tpu_custom_call.1} parent=1 // pred_fallthru
      _
    // Predicated region
    $region46: #{tpu_custom_call.1} parent=1 // pred_check
      _
    $region47: #{tpu_custom_call.1} parent=1 // pred_check_branch
      %96 = sbr.rel (0) target = $region49
    $region48: #{tpu_custom_call.1} parent=1 // pred_region
      %97 = dma.done [#allocation6], 4096
    $region49: #{tpu_custom_call.1} parent=1 // pred_fallthru
      _
    // Predicated region
    $region50: #{tpu_custom_call.1} parent=1 // pred_check
      _
    $region51: #{tpu_custom_call.1} parent=1 // pred_check_branch
      %99 = sbr.rel (0) target = $region53
    $region52: #{tpu_custom_call.1} parent=1 // pred_region
      %100 = dma.done [#allocation9], 3072
    $region53: #{tpu_custom_call.1} parent=1 // pred_fallthru
      _
    // Predicated region
    $region54: #{tpu_custom_call.1} parent=1 // pred_check
      _
    $region55: #{tpu_custom_call.1} parent=1 // pred_check_branch
      %102 = sbr.rel (0) target = $region57
    $region56: #{tpu_custom_call.1} parent=1 // pred_region
      %103 = dma.done [#allocation9], 1024
    $region57: #{tpu_custom_call.1} parent=1 // pred_fallthru
      _
    %v105 = vld [vmem:[#allocation2] sm:$0xff]
    %v106 = vld [vmem:[#allocation2 + $0x8] sm:$0xff]
    %v107 = vld [vmem:[#allocation2 + $0x10] sm:$0xff]
    %v108 = vld [vmem:[#allocation2 + $0x18] sm:$0xff]
    %v109 = vld [vmem:[#allocation2 + $0x20] sm:$0xff]
    %v110 = vld [vmem:[#allocation2 + $0x28] sm:$0xff]
    %v111 = vld [vmem:[#allocation2 + $0x30] sm:$0xff]
    %v112 = vld [vmem:[#allocation2 + $0x38] sm:$0xff]
    %v113 = vld [vmem:[#allocation2 + $0x40] sm:$0xff]
    %v114 = vld [vmem:[#allocation2 + $0x48] sm:$0xff]
    %v115 = vld [vmem:[#allocation2 + $0x50] sm:$0xff]
    %v116 = vld [vmem:[#allocation2 + $0x58] sm:$0xff]
    %v117 = vld [vmem:[#allocation2 + $0x60] sm:$0xff]
    %v118 = vld [vmem:[#allocation2 + $0x68] sm:$0xff]
    %v119 = vld [vmem:[#allocation2 + $0x70] sm:$0xff]
    %v120 = vld [vmem:[#allocation2 + $0x78] sm:$0xff]
    %v121 = vld [vmem:[#allocation5] sm:$0xff]
    %v122 = vld [vmem:[#allocation5 + $0x8] sm:$0xff]
    %v123 = vld [vmem:[#allocation5 + $0x10] sm:$0xff]
    %v124 = vld [vmem:[#allocation5 + $0x18] sm:$0xff]
    %v125 = vld [vmem:[#allocation5 + $0x20] sm:$0xff]
    %v126 = vld [vmem:[#allocation5 + $0x28] sm:$0xff]
    %v127 = vld [vmem:[#allocation5 + $0x30] sm:$0xff]
    %v128 = vld [vmem:[#allocation5 + $0x38] sm:$0xff]
    %v129 = vld [vmem:[#allocation5 + $0x40] sm:$0xff]
    %v130 = vld [vmem:[#allocation5 + $0x48] sm:$0xff]
    %v131 = vld [vmem:[#allocation5 + $0x50] sm:$0xff]
    %v132 = vld [vmem:[#allocation5 + $0x58] sm:$0xff]
    %v133 = vld [vmem:[#allocation5 + $0x60] sm:$0xff]
    %v134 = vld [vmem:[#allocation5 + $0x68] sm:$0xff]
    %v135 = vld [vmem:[#allocation5 + $0x70] sm:$0xff]
    %v136 = vld [vmem:[#allocation5 + $0x78] sm:$0xff]
    %v137 = vpack.c.bf16 %v106, %v105
    %v138 = vpack.c.bf16 %v108, %v107
    %v139 = vpack.c.bf16 %v110, %v109
    %v140 = vpack.c.bf16 %v112, %v111
    %v141 = vpack.c.bf16 %v114, %v113
    %v142 = vpack.c.bf16 %v116, %v115
    %v143 = vpack.c.bf16 %v118, %v117
    %v144 = vpack.c.bf16 %v120, %v119
    %v145 = vld [vmem:[#allocation7] sm:$0xff]
    %v146 = vld [vmem:[#allocation7 + $0x8] sm:$0xff]
    %v147 = vld [vmem:[#allocation7 + $0x10] sm:$0xff]
    %v148 = vld [vmem:[#allocation7 + $0x18] sm:$0xff]
    %v149 = vld [vmem:[#allocation7 + $0x20] sm:$0xff]
    %v150 = vld [vmem:[#allocation7 + $0x28] sm:$0xff]
    %v151 = vld [vmem:[#allocation7 + $0x30] sm:$0xff]
    %v152 = vld [vmem:[#allocation7 + $0x38] sm:$0xff]
    %v153 = vld [vmem:[#allocation7 + $0x40] sm:$0xff]
    %v154 = vld [vmem:[#allocation7 + $0x48] sm:$0xff]
    %v155 = vld [vmem:[#allocation7 + $0x50] sm:$0xff]
    %v156 = vld [vmem:[#allocation7 + $0x58] sm:$0xff]
    %v157 = vld [vmem:[#allocation7 + $0x60] sm:$0xff]
    %v158 = vld [vmem:[#allocation7 + $0x68] sm:$0xff]
    %v159 = vld [vmem:[#allocation7 + $0x70] sm:$0xff]
    %v160 = vld [vmem:[#allocation7 + $0x78] sm:$0xff]
    %v161 = vpack.c.bf16 %v122, %v121
    %v162 = vpack.c.bf16 %v124, %v123
    %v163 = vpack.c.bf16 %v126, %v125
    %v164 = vpack.c.bf16 %v128, %v127
    %v165 = vpack.c.bf16 %v130, %v129
    %v166 = vpack.c.bf16 %v132, %v131
    %v167 = vpack.c.bf16 %v134, %v133
    %v168 = vpack.c.bf16 %v136, %v135
    %v169 = vld [vmem:[#allocation7 + $0x80] sm:$0xff]
    %v170 = vld [vmem:[#allocation7 + $0x88] sm:$0xff]
    %v171 = vld [vmem:[#allocation7 + $0x90] sm:$0xff]
    %v172 = vld [vmem:[#allocation7 + $0x98] sm:$0xff]
    %v173 = vld [vmem:[#allocation7 + $0xa0] sm:$0xff]
    %v174 = vld [vmem:[#allocation7 + $0xa8] sm:$0xff]
    %v175 = vld [vmem:[#allocation7 + $0xb0] sm:$0xff]
    %v176 = vld [vmem:[#allocation7 + $0xb8] sm:$0xff]
    %v177 = vld [vmem:[#allocation7 + $0xc0] sm:$0xff]
    %v178 = vld [vmem:[#allocation7 + $0xc8] sm:$0xff]
    %v179 = vld [vmem:[#allocation7 + $0xd0] sm:$0xff]
    %v180 = vld [vmem:[#allocation7 + $0xd8] sm:$0xff]
    %v181 = vld [vmem:[#allocation7 + $0xe0] sm:$0xff]
    %v182 = vld [vmem:[#allocation7 + $0xe8] sm:$0xff]
    %v183 = vld [vmem:[#allocation7 + $0xf0] sm:$0xff]
    %v184 = vld [vmem:[#allocation7 + $0xf8] sm:$0xff]
    %v201 = vunpack.c.l.b16 %v169
    %v202 = vunpack.c.h.b16 %v169
    %v203 = vunpack.c.l.b16 %v170
    %v204 = vunpack.c.h.b16 %v170
    %v205 = vunpack.c.l.b16 %v171
    %v206 = vunpack.c.h.b16 %v171
    %v207 = vunpack.c.l.b16 %v172
    %v208 = vunpack.c.h.b16 %v172
    %v209 = vunpack.c.l.b16 %v173
    %v210 = vunpack.c.h.b16 %v173
    %v211 = vunpack.c.l.b16 %v174
    %v212 = vunpack.c.h.b16 %v174
    %v213 = vunpack.c.l.b16 %v175
    %v214 = vunpack.c.h.b16 %v175
    %v215 = vunpack.c.l.b16 %v176
    %v216 = vunpack.c.h.b16 %v176
    %v217 = vunpack.c.l.b16 %v177
    %v218 = vunpack.c.h.b16 %v177
    %v219 = vunpack.c.l.b16 %v178
    %v220 = vunpack.c.h.b16 %v178
    %v221 = vunpack.c.l.b16 %v179
    %v222 = vunpack.c.h.b16 %v179
    %v223 = vunpack.c.l.b16 %v180
    %v224 = vunpack.c.h.b16 %v180
    %v225 = vunpack.c.l.b16 %v181
    %v226 = vunpack.c.h.b16 %v181
    %v227 = vunpack.c.l.b16 %v182
    %v228 = vunpack.c.h.b16 %v182
    %v229 = vunpack.c.l.b16 %v183
    %v230 = vunpack.c.h.b16 %v183
    %v231 = vunpack.c.l.b16 %v184
    %v232 = vunpack.c.h.b16 %v184
    %v233 = vpack.c.b16 %v203, %v201
    %v234 = vpack.c.b16 %v204, %v202
    %v235 = vpack.c.b16 %v207, %v205
    %v236 = vpack.c.b16 %v208, %v206
    %v237 = vpack.c.b16 %v211, %v209
    %v238 = vpack.c.b16 %v212, %v210
    %v239 = vpack.c.b16 %v215, %v213
    %v240 = vpack.c.b16 %v216, %v214
    %v241 = vpack.c.b16 %v219, %v217
    %v242 = vpack.c.b16 %v220, %v218
    %v243 = vpack.c.b16 %v223, %v221
    %v244 = vpack.c.b16 %v224, %v222
    %v245 = vpack.c.b16 %v227, %v225
    %v246 = vpack.c.b16 %v228, %v226
    %v247 = vpack.c.b16 %v231, %v229
    %v248 = vpack.c.b16 %v232, %v230
    %265 = vmatprep.subr.bf16.mxu0 %v248
    %266 = vmatpush1.bf16.msra.mxu0 %v247
    %267 = vmatprep.subr.bf16.mxu0 %v246
    %268 = vmatpush1.bf16.msra.mxu0 %v245
    %269 = vmatprep.subr.bf16.mxu0 %v244
    %270 = vmatpush1.bf16.msra.mxu0 %v243
    %271 = vmatprep.subr.bf16.mxu0 %v242
    %272 = vmatpush1.bf16.msra.mxu0 %v241
    %273 = vmatprep.subr.bf16.mxu0 %v240
    %274 = vmatpush1.bf16.msra.mxu0 %v239
    %275 = vmatprep.subr.bf16.mxu0 %v238
    %276 = vmatpush1.bf16.msra.mxu0 %v237
    %277 = vmatprep.subr.bf16.mxu0 %v236
    %278 = vmatpush1.bf16.msra.mxu0 %v235
    %279 = vmatprep.subr.bf16.mxu0 %v234
    %280 = vmatpush1.bf16.msra.mxu0 %v233
    %281 = vmatprep.subr.bf16.mxu0 0
    %282 = vmatpush2.bf16.msra.mxu0 0
    %283 = vmatprep.subr.bf16.mxu0 0
    %284 = vmatpush2.bf16.msra.mxu0 0
    %285 = vmatprep.subr.bf16.mxu0 0
    %286 = vmatpush2.bf16.msra.mxu0 0
    %287 = vmatprep.subr.bf16.mxu0 0
    %288 = vmatpush2.bf16.msra.mxu0 0
    %289 = vmatprep.subr.bf16.mxu0 0
    %290 = vmatpush2.bf16.msra.mxu0 0
    %291 = vmatprep.subr.bf16.mxu0 0
    %292 = vmatpush2.bf16.msra.mxu0 0
    %293 = vmatprep.subr.bf16.mxu0 0
    %294 = vmatpush2.bf16.msra.mxu0 0
    %295 = vmatprep.subr.bf16.mxu0 0
    %296 = vmatpush2.bf16.msra.mxu0 0
    %297 = vmatprep.mubr.bf16.mxu0 0
    %298 = vmatmul.mubr.bf16.gmra.mxu0 %v161
    %v299 = vpop.f32.mrf.mxu0
    %v300 = vadd.f32 0.0, %v299
    %v301 = vpop.f32.mrf.mxu0
    %v302 = vadd.f32 0.0, %v301
    %v303 = vpop.f32.mrf.mxu0
    %v304 = vadd.f32 0.0, %v303
    %v305 = vpop.f32.mrf.mxu0
    %v306 = vadd.f32 0.0, %v305
    %307 = vmatprep.mubr.bf16.mxu0 0
    %308 = vmatmul.mubr.bf16.gmra.mxu0 %v162
    %v309 = vpop.f32.mrf.mxu0
    %v310 = vadd.f32 0.0, %v309
    %v311 = vpop.f32.mrf.mxu0
    %v312 = vadd.f32 0.0, %v311
    %v313 = vpop.f32.mrf.mxu0
    %v314 = vadd.f32 0.0, %v313
    %v315 = vpop.f32.mrf.mxu0
    %v316 = vadd.f32 0.0, %v315
    %317 = vmatprep.mubr.bf16.mxu0 0
    %318 = vmatmul.mubr.bf16.gmra.mxu0 %v163
    %v319 = vpop.f32.mrf.mxu0
    %v320 = vadd.f32 0.0, %v319
    %v321 = vpop.f32.mrf.mxu0
    %v322 = vadd.f32 0.0, %v321
    %v323 = vpop.f32.mrf.mxu0
    %v324 = vadd.f32 0.0, %v323
    %v325 = vpop.f32.mrf.mxu0
    %v326 = vadd.f32 0.0, %v325
    %327 = vmatprep.mubr.bf16.mxu0 0
    %328 = vmatmul.mubr.bf16.gmra.mxu0 %v164
    %v329 = vpop.f32.mrf.mxu0
    %v330 = vadd.f32 0.0, %v329
    %v331 = vpop.f32.mrf.mxu0
    %v332 = vadd.f32 0.0, %v331
    %v333 = vpop.f32.mrf.mxu0
    %v334 = vadd.f32 0.0, %v333
    %v335 = vpop.f32.mrf.mxu0
    %v336 = vadd.f32 0.0, %v335
    %337 = vmatprep.mubr.bf16.mxu0 0
    %338 = vmatmul.mubr.bf16.gmra.mxu0 %v165
    %v339 = vpop.f32.mrf.mxu0
    %v340 = vadd.f32 0.0, %v339
    %v341 = vpop.f32.mrf.mxu0
    %v342 = vadd.f32 0.0, %v341
    %v343 = vpop.f32.mrf.mxu0
    %v344 = vadd.f32 0.0, %v343
    %v345 = vpop.f32.mrf.mxu0
    %v346 = vadd.f32 0.0, %v345
    %347 = vmatprep.mubr.bf16.mxu0 0
    %348 = vmatmul.mubr.bf16.gmra.mxu0 %v166
    %v349 = vpop.f32.mrf.mxu0
    %v350 = vadd.f32 0.0, %v349
    %v351 = vpop.f32.mrf.mxu0
    %v352 = vadd.f32 0.0, %v351
    %v353 = vpop.f32.mrf.mxu0
    %v354 = vadd.f32 0.0, %v353
    %v355 = vpop.f32.mrf.mxu0
    %v356 = vadd.f32 0.0, %v355
    %357 = vmatprep.mubr.bf16.mxu0 0
    %358 = vmatmul.mubr.bf16.gmra.mxu0 %v167
    %v359 = vpop.f32.mrf.mxu0
    %v360 = vadd.f32 0.0, %v359
    %v361 = vpop.f32.mrf.mxu0
    %v362 = vadd.f32 0.0, %v361
    %v363 = vpop.f32.mrf.mxu0
    %v364 = vadd.f32 0.0, %v363
    %v365 = vpop.f32.mrf.mxu0
    %v366 = vadd.f32 0.0, %v365
    %367 = vmatprep.mubr.bf16.mxu0 0
    %368 = vmatmul.mubr.bf16.gmra.mxu0 %v168
    %v369 = vpop.f32.mrf.mxu0
    %v370 = vadd.f32 0.0, %v369
    %v371 = vpop.f32.mrf.mxu0
    %v372 = vadd.f32 0.0, %v371
    %v373 = vpop.f32.mrf.mxu0
    %v374 = vadd.f32 0.0, %v373
    %v375 = vpop.f32.mrf.mxu0
    %v376 = vadd.f32 0.0, %v375
    %377 = vdwg.mxu0
    %v394 = vunpack.c.l.b16 %v145
    %v395 = vunpack.c.h.b16 %v145
    %v396 = vunpack.c.l.b16 %v146
    %v397 = vunpack.c.h.b16 %v146
    %v398 = vunpack.c.l.b16 %v147
    %v399 = vunpack.c.h.b16 %v147
    %v400 = vunpack.c.l.b16 %v148
    %v401 = vunpack.c.h.b16 %v148
    %v402 = vunpack.c.l.b16 %v149
    %v403 = vunpack.c.h.b16 %v149
    %v404 = vunpack.c.l.b16 %v150
    %v405 = vunpack.c.h.b16 %v150
    %v406 = vunpack.c.l.b16 %v151
    %v407 = vunpack.c.h.b16 %v151
    %v408 = vunpack.c.l.b16 %v152
    %v409 = vunpack.c.h.b16 %v152
    %v410 = vunpack.c.l.b16 %v153
    %v411 = vunpack.c.h.b16 %v153
    %v412 = vunpack.c.l.b16 %v154
    %v413 = vunpack.c.h.b16 %v154
    %v414 = vunpack.c.l.b16 %v155
    %v415 = vunpack.c.h.b16 %v155
    %v416 = vunpack.c.l.b16 %v156
    %v417 = vunpack.c.h.b16 %v156
    %v418 = vunpack.c.l.b16 %v157
    %v419 = vunpack.c.h.b16 %v157
    %v420 = vunpack.c.l.b16 %v158
    %v421 = vunpack.c.h.b16 %v158
    %v422 = vunpack.c.l.b16 %v159
    %v423 = vunpack.c.h.b16 %v159
    %v424 = vunpack.c.l.b16 %v160
    %v425 = vunpack.c.h.b16 %v160
    %v426 = vpack.c.b16 %v396, %v394
    %v427 = vpack.c.b16 %v397, %v395
    %v428 = vpack.c.b16 %v400, %v398
    %v429 = vpack.c.b16 %v401, %v399
    %v430 = vpack.c.b16 %v404, %v402
    %v431 = vpack.c.b16 %v405, %v403
    %v432 = vpack.c.b16 %v408, %v406
    %v433 = vpack.c.b16 %v409, %v407
    %v434 = vpack.c.b16 %v412, %v410
    %v435 = vpack.c.b16 %v413, %v411
    %v436 = vpack.c.b16 %v416, %v414
    %v437 = vpack.c.b16 %v417, %v415
    %v438 = vpack.c.b16 %v420, %v418
    %v439 = vpack.c.b16 %v421, %v419
    %v440 = vpack.c.b16 %v424, %v422
    %v441 = vpack.c.b16 %v425, %v423
    %458 = vmatprep.subr.bf16.mxu0 %v441
    %459 = vmatpush1.bf16.msra.mxu0 %v440
    %460 = vmatprep.subr.bf16.mxu0 %v439
    %461 = vmatpush1.bf16.msra.mxu0 %v438
    %462 = vmatprep.subr.bf16.mxu0 %v437
    %463 = vmatpush1.bf16.msra.mxu0 %v436
    %464 = vmatprep.subr.bf16.mxu0 %v435
    %465 = vmatpush1.bf16.msra.mxu0 %v434
    %466 = vmatprep.subr.bf16.mxu0 %v433
    %467 = vmatpush1.bf16.msra.mxu0 %v432
    %468 = vmatprep.subr.bf16.mxu0 %v431
    %469 = vmatpush1.bf16.msra.mxu0 %v430
    %470 = vmatprep.subr.bf16.mxu0 %v429
    %471 = vmatpush1.bf16.msra.mxu0 %v428
    %472 = vmatprep.subr.bf16.mxu0 %v427
    %473 = vmatpush1.bf16.msra.mxu0 %v426
    %474 = vmatprep.subr.bf16.mxu0 0
    %475 = vmatpush2.bf16.msra.mxu0 0
    %476 = vmatprep.subr.bf16.mxu0 0
    %477 = vmatpush2.bf16.msra.mxu0 0
    %478 = vmatprep.subr.bf16.mxu0 0
    %479 = vmatpush2.bf16.msra.mxu0 0
    %480 = vmatprep.subr.bf16.mxu0 0
    %481 = vmatpush2.bf16.msra.mxu0 0
    %482 = vmatprep.subr.bf16.mxu0 0
    %483 = vmatpush2.bf16.msra.mxu0 0
    %484 = vmatprep.subr.bf16.mxu0 0
    %485 = vmatpush2.bf16.msra.mxu0 0
    %486 = vmatprep.subr.bf16.mxu0 0
    %487 = vmatpush2.bf16.msra.mxu0 0
    %488 = vmatprep.subr.bf16.mxu0 0
    %489 = vmatpush2.bf16.msra.mxu0 0
    %490 = vmatprep.mubr.bf16.mxu0 0
    %491 = vmatmul.mubr.bf16.gmra.mxu0 %v137
    %v492 = vpop.f32.mrf.mxu0
    %v493 = vadd.f32 %v300, %v492
    %v494 = vpop.f32.mrf.mxu0
    %v495 = vadd.f32 %v302, %v494
    %v496 = vpop.f32.mrf.mxu0
    %v497 = vadd.f32 %v304, %v496
    %v498 = vpop.f32.mrf.mxu0
    %v499 = vadd.f32 %v306, %v498
    %500 = vmatprep.mubr.bf16.mxu0 0
    %501 = vmatmul.mubr.bf16.gmra.mxu0 %v138
    %v502 = vpop.f32.mrf.mxu0
    %v503 = vadd.f32 %v310, %v502
    %v504 = vpop.f32.mrf.mxu0
    %v505 = vadd.f32 %v312, %v504
    %v506 = vpop.f32.mrf.mxu0
    %v507 = vadd.f32 %v314, %v506
    %v508 = vpop.f32.mrf.mxu0
    %v509 = vadd.f32 %v316, %v508
    %510 = vmatprep.mubr.bf16.mxu0 0
    %511 = vmatmul.mubr.bf16.gmra.mxu0 %v139
    %v512 = vpop.f32.mrf.mxu0
    %v513 = vadd.f32 %v320, %v512
    %v514 = vpop.f32.mrf.mxu0
    %v515 = vadd.f32 %v322, %v514
    %v516 = vpop.f32.mrf.mxu0
    %v517 = vadd.f32 %v324, %v516
    %v518 = vpop.f32.mrf.mxu0
    %v519 = vadd.f32 %v326, %v518
    %520 = vmatprep.mubr.bf16.mxu0 0
    %521 = vmatmul.mubr.bf16.gmra.mxu0 %v140
    %v522 = vpop.f32.mrf.mxu0
    %v523 = vadd.f32 %v330, %v522
    %v524 = vpop.f32.mrf.mxu0
    %v525 = vadd.f32 %v332, %v524
    %v526 = vpop.f32.mrf.mxu0
    %v527 = vadd.f32 %v334, %v526
    %v528 = vpop.f32.mrf.mxu0
    %v529 = vadd.f32 %v336, %v528
    %530 = vmatprep.mubr.bf16.mxu0 0
    %531 = vmatmul.mubr.bf16.gmra.mxu0 %v141
    %v532 = vpop.f32.mrf.mxu0
    %v533 = vadd.f32 %v340, %v532
    %v534 = vpop.f32.mrf.mxu0
    %v535 = vadd.f32 %v342, %v534
    %v536 = vpop.f32.mrf.mxu0
    %v537 = vadd.f32 %v344, %v536
    %v538 = vpop.f32.mrf.mxu0
    %v539 = vadd.f32 %v346, %v538
    %540 = vmatprep.mubr.bf16.mxu0 0
    %541 = vmatmul.mubr.bf16.gmra.mxu0 %v142
    %v542 = vpop.f32.mrf.mxu0
    %v543 = vadd.f32 %v350, %v542
    %v544 = vpop.f32.mrf.mxu0
    %v545 = vadd.f32 %v352, %v544
    %v546 = vpop.f32.mrf.mxu0
    %v547 = vadd.f32 %v354, %v546
    %v548 = vpop.f32.mrf.mxu0
    %v549 = vadd.f32 %v356, %v548
    %550 = vmatprep.mubr.bf16.mxu0 0
    %551 = vmatmul.mubr.bf16.gmra.mxu0 %v143
    %v552 = vpop.f32.mrf.mxu0
    %v553 = vadd.f32 %v360, %v552
    %v554 = vpop.f32.mrf.mxu0
    %v555 = vadd.f32 %v362, %v554
    %v556 = vpop.f32.mrf.mxu0
    %v557 = vadd.f32 %v364, %v556
    %v558 = vpop.f32.mrf.mxu0
    %v559 = vadd.f32 %v366, %v558
    %560 = vmatprep.mubr.bf16.mxu0 0
    %561 = vmatmul.mubr.bf16.gmra.mxu0 %v144
    %v562 = vpop.f32.mrf.mxu0
    %v563 = vadd.f32 %v370, %v562
    %v564 = vpop.f32.mrf.mxu0
    %v565 = vadd.f32 %v372, %v564
    %v566 = vpop.f32.mrf.mxu0
    %v567 = vadd.f32 %v374, %v566
    %v568 = vpop.f32.mrf.mxu0
    %v569 = vadd.f32 %v376, %v568
    %570 = vdwg.mxu0
    %v571 = vld [vmem:[%s4] sm:$0x3]
    %v573 = vlaneseq
    %v574 = vshrl.u32 %v573, 7
    %v575 = vsub.s32 0, %v574
    %v576 = vrot.slane %v571, %v575
    %v577 = vlaneseq
    %v578 = vshrl.u32 %v577, 7
    %v579 = vsub.s32 1, %v578
    %v580 = vrot.slane %v571, %v579
    %v583 = vadd.f32 %v493, %v576
    %v584 = vadd.f32 %v495, %v580
    %v585 = vadd.f32 %v497, %v576
    %v586 = vadd.f32 %v499, %v580
    %v587 = vadd.f32 %v503, %v576
    %v588 = vadd.f32 %v505, %v580
    %v589 = vadd.f32 %v507, %v576
    %v590 = vadd.f32 %v509, %v580
    %v591 = vadd.f32 %v513, %v576
    %v592 = vadd.f32 %v515, %v580
    %v593 = vadd.f32 %v517, %v576
    %v594 = vadd.f32 %v519, %v580
    %v595 = vadd.f32 %v523, %v576
    %v596 = vadd.f32 %v525, %v580
    %v597 = vadd.f32 %v527, %v576
    %v598 = vadd.f32 %v529, %v580
    %v599 = vadd.f32 %v533, %v576
    %v600 = vadd.f32 %v535, %v580
    %v601 = vadd.f32 %v537, %v576
    %v602 = vadd.f32 %v539, %v580
    %v603 = vadd.f32 %v543, %v576
    %v604 = vadd.f32 %v545, %v580
    %v605 = vadd.f32 %v547, %v576
    %v606 = vadd.f32 %v549, %v580
    %v607 = vadd.f32 %v553, %v576
    %v608 = vadd.f32 %v555, %v580
    %v609 = vadd.f32 %v557, %v576
    %v610 = vadd.f32 %v559, %v580
    %v611 = vadd.f32 %v563, %v576
    %v612 = vadd.f32 %v565, %v580
    %v613 = vadd.f32 %v567, %v576
    %v614 = vadd.f32 %v569, %v580
    %v615 = vxor.u32 %v583, 2147483648
    %v616 = vxor.u32 %v585, 2147483648
    %v617 = vxor.u32 %v587, 2147483648
    %v618 = vxor.u32 %v589, 2147483648
    %v619 = vxor.u32 %v591, 2147483648
    %v620 = vxor.u32 %v593, 2147483648
    %v621 = vxor.u32 %v595, 2147483648
    %v622 = vxor.u32 %v597, 2147483648
    %v623 = vxor.u32 %v599, 2147483648
    %v624 = vxor.u32 %v601, 2147483648
    %v625 = vxor.u32 %v603, 2147483648
    %v626 = vxor.u32 %v605, 2147483648
    %v627 = vxor.u32 %v607, 2147483648
    %v628 = vxor.u32 %v609, 2147483648
    %v629 = vxor.u32 %v611, 2147483648
    %v630 = vxor.u32 %v613, 2147483648
    %v631 = vmul.f32 %v615, 1.442695
    %v632 = vpow.pop %v631
    %v633 = vmul.f32 %v616, 1.442695
    %v634 = vpow.pop %v633
    %v635 = vmul.f32 %v617, 1.442695
    %v636 = vpow.pop %v635
    %v637 = vmul.f32 %v618, 1.442695
    %v638 = vpow.pop %v637
    %v639 = vmul.f32 %v619, 1.442695
    %v640 = vpow.pop %v639
    %v641 = vmul.f32 %v620, 1.442695
    %v642 = vpow.pop %v641
    %v643 = vmul.f32 %v621, 1.442695
    %v644 = vpow.pop %v643
    %v645 = vmul.f32 %v622, 1.442695
    %v646 = vpow.pop %v645
    %v647 = vmul.f32 %v623, 1.442695
    %v648 = vpow.pop %v647
    %v649 = vmul.f32 %v624, 1.442695
    %v650 = vpow.pop %v649
    %v651 = vmul.f32 %v625, 1.442695
    %v652 = vpow.pop %v651
    %v653 = vmul.f32 %v626, 1.442695
    %v654 = vpow.pop %v653
    %v655 = vmul.f32 %v627, 1.442695
    %v656 = vpow.pop %v655
    %v657 = vmul.f32 %v628, 1.442695
    %v658 = vpow.pop %v657
    %v659 = vmul.f32 %v629, 1.442695
    %v660 = vpow.pop %v659
    %v661 = vmul.f32 %v630, 1.442695
    %v662 = vpow.pop %v661
    %v663 = vadd.f32 %v632, 1.0
    %v664 = vadd.f32 %v634, 1.0
    %v665 = vadd.f32 %v636, 1.0
    %v666 = vadd.f32 %v638, 1.0
    %v667 = vadd.f32 %v640, 1.0
    %v668 = vadd.f32 %v642, 1.0
    %v669 = vadd.f32 %v644, 1.0
    %v670 = vadd.f32 %v646, 1.0
    %v671 = vadd.f32 %v648, 1.0
    %v672 = vadd.f32 %v650, 1.0
    %v673 = vadd.f32 %v652, 1.0
    %v674 = vadd.f32 %v654, 1.0
    %v675 = vadd.f32 %v656, 1.0
    %v676 = vadd.f32 %v658, 1.0
    %v677 = vadd.f32 %v660, 1.0
    %v678 = vadd.f32 %v662, 1.0
    %v679 = vrcp.pop %v663
    %v680 = vmul.f32 1.0, %v679
    %v681 = vrcp.pop %v664
    %v682 = vmul.f32 1.0, %v681
    %v683 = vrcp.pop %v665
    %v684 = vmul.f32 1.0, %v683
    %v685 = vrcp.pop %v666
    %v686 = vmul.f32 1.0, %v685
    %v687 = vrcp.pop %v667
    %v688 = vmul.f32 1.0, %v687
    %v689 = vrcp.pop %v668
    %v690 = vmul.f32 1.0, %v689
    %v691 = vrcp.pop %v669
    %v692 = vmul.f32 1.0, %v691
    %v693 = vrcp.pop %v670
    %v694 = vmul.f32 1.0, %v693
    %v695 = vrcp.pop %v671
    %v696 = vmul.f32 1.0, %v695
    %v697 = vrcp.pop %v672
    %v698 = vmul.f32 1.0, %v697
    %v699 = vrcp.pop %v673
    %v700 = vmul.f32 1.0, %v699
    %v701 = vrcp.pop %v674
    %v702 = vmul.f32 1.0, %v701
    %v703 = vrcp.pop %v675
    %v704 = vmul.f32 1.0, %v703
    %v705 = vrcp.pop %v676
    %v706 = vmul.f32 1.0, %v705
    %v707 = vrcp.pop %v677
    %v708 = vmul.f32 1.0, %v707
    %v709 = vrcp.pop %v678
    %v710 = vmul.f32 1.0, %v709
    %v711 = vtanh.pop %v584
    %v712 = vtanh.pop %v586
    %v713 = vtanh.pop %v588
    %v714 = vtanh.pop %v590
    %v715 = vtanh.pop %v592
    %v716 = vtanh.pop %v594
    %v717 = vtanh.pop %v596
    %v718 = vtanh.pop %v598
    %v719 = vtanh.pop %v600
    %v720 = vtanh.pop %v602
    %v721 = vtanh.pop %v604
    %v722 = vtanh.pop %v606
    %v723 = vtanh.pop %v608
    %v724 = vtanh.pop %v610
    %v725 = vtanh.pop %v612
    %v726 = vtanh.pop %v614
    %v727 = vmul.f32 %v680, %v711
    %v728 = vmul.f32 %v682, %v712
    %v729 = vmul.f32 %v684, %v713
    %v730 = vmul.f32 %v686, %v714
    %v731 = vmul.f32 %v688, %v715
    %v732 = vmul.f32 %v690, %v716
    %v733 = vmul.f32 %v692, %v717
    %v734 = vmul.f32 %v694, %v718
    %v735 = vmul.f32 %v696, %v719
    %v736 = vmul.f32 %v698, %v720
    %v737 = vmul.f32 %v700, %v721
    %v738 = vmul.f32 %v702, %v722
    %v739 = vmul.f32 %v704, %v723
    %v740 = vmul.f32 %v706, %v724
    %v741 = vmul.f32 %v708, %v725
    %v742 = vmul.f32 %v710, %v726
    %v743 = vadd.f32 %v105, %v727
    %v744 = vadd.f32 %v106, %v728
    %v745 = vadd.f32 %v107, %v729
    %v746 = vadd.f32 %v108, %v730
    %v747 = vadd.f32 %v109, %v731
    %v748 = vadd.f32 %v110, %v732
    %v749 = vadd.f32 %v111, %v733
    %v750 = vadd.f32 %v112, %v734
    %v751 = vadd.f32 %v113, %v735
    %v752 = vadd.f32 %v114, %v736
    %v753 = vadd.f32 %v115, %v737
    %v754 = vadd.f32 %v116, %v738
    %v755 = vadd.f32 %v117, %v739
    %v756 = vadd.f32 %v118, %v740
    %v757 = vadd.f32 %v119, %v741
    %v758 = vadd.f32 %v120, %v742
    %759 = vst [vmem:[#allocation11] sm:$0xff] %v743
    %760 = vst [vmem:[#allocation11 + $0x8] sm:$0xff] %v744
    %761 = vst [vmem:[#allocation11 + $0x10] sm:$0xff] %v745
    %762 = vst [vmem:[#allocation11 + $0x18] sm:$0xff] %v746
    %763 = vst [vmem:[#allocation11 + $0x20] sm:$0xff] %v747
    %764 = vst [vmem:[#allocation11 + $0x28] sm:$0xff] %v748
    %765 = vst [vmem:[#allocation11 + $0x30] sm:$0xff] %v749
    %766 = vst [vmem:[#allocation11 + $0x38] sm:$0xff] %v750
    %767 = vst [vmem:[#allocation11 + $0x40] sm:$0xff] %v751
    %768 = vst [vmem:[#allocation11 + $0x48] sm:$0xff] %v752
    %769 = vst [vmem:[#allocation11 + $0x50] sm:$0xff] %v753
    %770 = vst [vmem:[#allocation11 + $0x58] sm:$0xff] %v754
    %771 = vst [vmem:[#allocation11 + $0x60] sm:$0xff] %v755
    %772 = vst [vmem:[#allocation11 + $0x68] sm:$0xff] %v756
    %773 = vst [vmem:[#allocation11 + $0x70] sm:$0xff] %v757
    %774 = vst [vmem:[#allocation11 + $0x78] sm:$0xff] %v758
    %v775 = vpack.c.bf16 %v744, %v743
    %v776 = vpack.c.bf16 %v746, %v745
    %v777 = vpack.c.bf16 %v748, %v747
    %v778 = vpack.c.bf16 %v750, %v749
    %v779 = vpack.c.bf16 %v752, %v751
    %v780 = vpack.c.bf16 %v754, %v753
    %v781 = vpack.c.bf16 %v756, %v755
    %v782 = vpack.c.bf16 %v758, %v757
    %v783 = vld [vmem:[#allocation8] sm:$0xff]
    %v784 = vld [vmem:[#allocation8 + $0x8] sm:$0xf]
    %v785 = vld [vmem:[#allocation8 + $0xc] sm:$0xff]
    %v786 = vld [vmem:[#allocation8 + $0x14] sm:$0xf]
    %v787 = vld [vmem:[#allocation8 + $0x18] sm:$0xff]
    %v788 = vld [vmem:[#allocation8 + $0x20] sm:$0xf]
    %v789 = vld [vmem:[#allocation8 + $0x24] sm:$0xff]
    %v790 = vld [vmem:[#allocation8 + $0x2c] sm:$0xf]
    %v791 = vld [vmem:[#allocation8 + $0x30] sm:$0xff]
    %v792 = vld [vmem:[#allocation8 + $0x38] sm:$0xf]
    %v793 = vld [vmem:[#allocation8 + $0x3c] sm:$0xff]
    %v794 = vld [vmem:[#allocation8 + $0x44] sm:$0xf]
    %v795 = vld [vmem:[#allocation8 + $0x48] sm:$0xff]
    %v796 = vld [vmem:[#allocation8 + $0x50] sm:$0xf]
    %v797 = vld [vmem:[#allocation8 + $0x54] sm:$0xff]
    %v798 = vld [vmem:[#allocation8 + $0x5c] sm:$0xf]
    %v799 = vld [vmem:[#allocation8 + $0x60] sm:$0xff]
    %v800 = vld [vmem:[#allocation8 + $0x68] sm:$0xf]
    %v801 = vld [vmem:[#allocation8 + $0x6c] sm:$0xff]
    %v802 = vld [vmem:[#allocation8 + $0x74] sm:$0xf]
    %v803 = vld [vmem:[#allocation8 + $0x78] sm:$0xff]
    %v804 = vld [vmem:[#allocation8 + $0x80] sm:$0xf]
    %v805 = vld [vmem:[#allocation8 + $0x84] sm:$0xff]
    %v806 = vld [vmem:[#allocation8 + $0x8c] sm:$0xf]
    %v807 = vld [vmem:[#allocation8 + $0x90] sm:$0xff]
    %v808 = vld [vmem:[#allocation8 + $0x98] sm:$0xf]
    %v809 = vld [vmem:[#allocation8 + $0x9c] sm:$0xff]
    %v810 = vld [vmem:[#allocation8 + $0xa4] sm:$0xf]
    %v811 = vld [vmem:[#allocation8 + $0xa8] sm:$0xff]
    %v812 = vld [vmem:[#allocation8 + $0xb0] sm:$0xf]
    %v813 = vld [vmem:[#allocation8 + $0xb4] sm:$0xff]
    %v814 = vld [vmem:[#allocation8 + $0xbc] sm:$0xf]
    %v847 = vunpack.c.l.b16 %v783
    %v848 = vunpack.c.h.b16 %v783
    %v849 = vunpack.c.l.b16 %v784
    %v850 = vunpack.c.l.b16 %v785
    %v851 = vunpack.c.h.b16 %v785
    %v852 = vunpack.c.l.b16 %v786
    %v853 = vunpack.c.l.b16 %v787
    %v854 = vunpack.c.h.b16 %v787
    %v855 = vunpack.c.l.b16 %v788
    %v856 = vunpack.c.l.b16 %v789
    %v857 = vunpack.c.h.b16 %v789
    %v858 = vunpack.c.l.b16 %v790
    %v859 = vunpack.c.l.b16 %v791
    %v860 = vunpack.c.h.b16 %v791
    %v861 = vunpack.c.l.b16 %v792
    %v862 = vunpack.c.l.b16 %v793
    %v863 = vunpack.c.h.b16 %v793
    %v864 = vunpack.c.l.b16 %v794
    %v865 = vunpack.c.l.b16 %v795
    %v866 = vunpack.c.h.b16 %v795
    %v867 = vunpack.c.l.b16 %v796
    %v868 = vunpack.c.l.b16 %v797
    %v869 = vunpack.c.h.b16 %v797
    %v870 = vunpack.c.l.b16 %v798
    %v871 = vunpack.c.l.b16 %v799
    %v872 = vunpack.c.h.b16 %v799
    %v873 = vunpack.c.l.b16 %v800
    %v874 = vunpack.c.l.b16 %v801
    %v875 = vunpack.c.h.b16 %v801
    %v876 = vunpack.c.l.b16 %v802
    %v877 = vunpack.c.l.b16 %v803
    %v878 = vunpack.c.h.b16 %v803
    %v879 = vunpack.c.l.b16 %v804
    %v880 = vunpack.c.l.b16 %v805
    %v881 = vunpack.c.h.b16 %v805
    %v882 = vunpack.c.l.b16 %v806
    %v883 = vunpack.c.l.b16 %v807
    %v884 = vunpack.c.h.b16 %v807
    %v885 = vunpack.c.l.b16 %v808
    %v886 = vunpack.c.l.b16 %v809
    %v887 = vunpack.c.h.b16 %v809
    %v888 = vunpack.c.l.b16 %v810
    %v889 = vunpack.c.l.b16 %v811
    %v890 = vunpack.c.h.b16 %v811
    %v891 = vunpack.c.l.b16 %v812
    %v892 = vunpack.c.l.b16 %v813
    %v893 = vunpack.c.h.b16 %v813
    %v894 = vunpack.c.l.b16 %v814
    %v895 = vpack.c.b16 %v850, %v847
    %v896 = vpack.c.b16 %v851, %v848
    %v897 = vpack.c.b16 %v852, %v849
    %v898 = vpack.c.b16 %v856, %v853
    %v899 = vpack.c.b16 %v857, %v854
    %v900 = vpack.c.b16 %v858, %v855
    %v901 = vpack.c.b16 %v862, %v859
    %v902 = vpack.c.b16 %v863, %v860
    %v903 = vpack.c.b16 %v864, %v861
    %v904 = vpack.c.b16 %v868, %v865
    %v905 = vpack.c.b16 %v869, %v866
    %v906 = vpack.c.b16 %v870, %v867
    %v907 = vpack.c.b16 %v874, %v871
    %v908 = vpack.c.b16 %v875, %v872
    %v909 = vpack.c.b16 %v876, %v873
    %v910 = vpack.c.b16 %v880, %v877
    %v911 = vpack.c.b16 %v881, %v878
    %v912 = vpack.c.b16 %v882, %v879
    %v913 = vpack.c.b16 %v886, %v883
    %v914 = vpack.c.b16 %v887, %v884
    %v915 = vpack.c.b16 %v888, %v885
    %v916 = vpack.c.b16 %v892, %v889
    %v917 = vpack.c.b16 %v893, %v890
    %v918 = vpack.c.b16 %v894, %v891
    %943 = vmatprep.subr.bf16.mxu0 %v917
    %944 = vmatpush1.bf16.msra.mxu0 %v916
    %945 = vmatprep.subr.bf16.mxu0 %v914
    %946 = vmatpush1.bf16.msra.mxu0 %v913
    %947 = vmatprep.subr.bf16.mxu0 %v911
    %948 = vmatpush1.bf16.msra.mxu0 %v910
    %949 = vmatprep.subr.bf16.mxu0 %v908
    %950 = vmatpush1.bf16.msra.mxu0 %v907
    %951 = vmatprep.subr.bf16.mxu0 %v905
    %952 = vmatpush1.bf16.msra.mxu0 %v904
    %953 = vmatprep.subr.bf16.mxu0 %v902
    %954 = vmatpush1.bf16.msra.mxu0 %v901
    %955 = vmatprep.subr.bf16.mxu0 %v899
    %956 = vmatpush1.bf16.msra.mxu0 %v898
    %957 = vmatprep.subr.bf16.mxu0 %v896
    %958 = vmatpush1.bf16.msra.mxu0 %v895
    %959 = vmatprep.subr.bf16.mxu0 0
    %960 = vmatpush2.bf16.msra.mxu0 0
    %961 = vmatprep.subr.bf16.mxu0 0
    %962 = vmatpush2.bf16.msra.mxu0 0
    %963 = vmatprep.subr.bf16.mxu0 0
    %964 = vmatpush2.bf16.msra.mxu0 0
    %965 = vmatprep.subr.bf16.mxu0 0
    %966 = vmatpush2.bf16.msra.mxu0 0
    %967 = vmatprep.subr.bf16.mxu0 0
    %968 = vmatpush2.bf16.msra.mxu0 0
    %969 = vmatprep.subr.bf16.mxu0 0
    %970 = vmatpush2.bf16.msra.mxu0 0
    %971 = vmatprep.subr.bf16.mxu0 0
    %972 = vmatpush2.bf16.msra.mxu0 0
    %973 = vmatprep.subr.bf16.mxu0 0
    %974 = vmatpush2.bf16.msra.mxu0 0
    %975 = vmatprep.mubr.bf16.mxu0 0
    %976 = vmatmul.mubr.bf16.gmra.mxu0 %v775
    %v977 = vpop.f32.mrf.mxu0
    %v978 = vadd.f32 0.0, %v977
    %v979 = vpop.f32.mrf.mxu0
    %v980 = vadd.f32 0.0, %v979
    %v981 = vpop.f32.mrf.mxu0
    %v982 = vadd.f32 0.0, %v981
    %v983 = vpop.f32.mrf.mxu0
    %v984 = vadd.f32 0.0, %v983
    %985 = vmatprep.mubr.bf16.mxu0 0
    %986 = vmatmul.mubr.bf16.gmra.mxu0 %v776
    %v987 = vpop.f32.mrf.mxu0
    %v988 = vadd.f32 0.0, %v987
    %v989 = vpop.f32.mrf.mxu0
    %v990 = vadd.f32 0.0, %v989
    %v991 = vpop.f32.mrf.mxu0
    %v992 = vadd.f32 0.0, %v991
    %v993 = vpop.f32.mrf.mxu0
    %v994 = vadd.f32 0.0, %v993
    %995 = vmatprep.mubr.bf16.mxu0 0
    %996 = vmatmul.mubr.bf16.gmra.mxu0 %v777
    %v997 = vpop.f32.mrf.mxu0
    %v998 = vadd.f32 0.0, %v997
    %v999 = vpop.f32.mrf.mxu0
    %v1000 = vadd.f32 0.0, %v999
    %v1001 = vpop.f32.mrf.mxu0
    %v1002 = vadd.f32 0.0, %v1001
    %v1003 = vpop.f32.mrf.mxu0
    %v1004 = vadd.f32 0.0, %v1003
    %1005 = vmatprep.mubr.bf16.mxu0 0
    %1006 = vmatmul.mubr.bf16.gmra.mxu0 %v778
    %v1007 = vpop.f32.mrf.mxu0
    %v1008 = vadd.f32 0.0, %v1007
    %v1009 = vpop.f32.mrf.mxu0
    %v1010 = vadd.f32 0.0, %v1009
    %v1011 = vpop.f32.mrf.mxu0
    %v1012 = vadd.f32 0.0, %v1011
    %v1013 = vpop.f32.mrf.mxu0
    %v1014 = vadd.f32 0.0, %v1013
    %1015 = vmatprep.mubr.bf16.mxu0 0
    %1016 = vmatmul.mubr.bf16.gmra.mxu0 %v779
    %v1017 = vpop.f32.mrf.mxu0
    %v1018 = vadd.f32 0.0, %v1017
    %v1019 = vpop.f32.mrf.mxu0
    %v1020 = vadd.f32 0.0, %v1019
    %v1021 = vpop.f32.mrf.mxu0
    %v1022 = vadd.f32 0.0, %v1021
    %v1023 = vpop.f32.mrf.mxu0
    %v1024 = vadd.f32 0.0, %v1023
    %1025 = vmatprep.mubr.bf16.mxu0 0
    %1026 = vmatmul.mubr.bf16.gmra.mxu0 %v780
    %v1027 = vpop.f32.mrf.mxu0
    %v1028 = vadd.f32 0.0, %v1027
    %v1029 = vpop.f32.mrf.mxu0
    %v1030 = vadd.f32 0.0, %v1029
    %v1031 = vpop.f32.mrf.mxu0
    %v1032 = vadd.f32 0.0, %v1031
    %v1033 = vpop.f32.mrf.mxu0
    %v1034 = vadd.f32 0.0, %v1033
    %1035 = vmatprep.mubr.bf16.mxu0 0
    %1036 = vmatmul.mubr.bf16.gmra.mxu0 %v781
    %v1037 = vpop.f32.mrf.mxu0
    %v1038 = vadd.f32 0.0, %v1037
    %v1039 = vpop.f32.mrf.mxu0
    %v1040 = vadd.f32 0.0, %v1039
    %v1041 = vpop.f32.mrf.mxu0
    %v1042 = vadd.f32 0.0, %v1041
    %v1043 = vpop.f32.mrf.mxu0
    %v1044 = vadd.f32 0.0, %v1043
    %1045 = vmatprep.mubr.bf16.mxu0 0
    %1046 = vmatmul.mubr.bf16.gmra.mxu0 %v782
    %v1047 = vpop.f32.mrf.mxu0
    %v1048 = vadd.f32 0.0, %v1047
    %v1049 = vpop.f32.mrf.mxu0
    %v1050 = vadd.f32 0.0, %v1049
    %v1051 = vpop.f32.mrf.mxu0
    %v1052 = vadd.f32 0.0, %v1051
    %v1053 = vpop.f32.mrf.mxu0
    %v1054 = vadd.f32 0.0, %v1053
    %1055 = vdwg.mxu0
    %1056 = vmatprep.subr.bf16.mxu0 0
    %1057 = vmatpush1.bf16.msra.mxu0 %v918
    %1058 = vmatprep.subr.bf16.mxu0 0
    %1059 = vmatpush1.bf16.msra.mxu0 %v915
    %1060 = vmatprep.subr.bf16.mxu0 0
    %1061 = vmatpush1.bf16.msra.mxu0 %v912
    %1062 = vmatprep.subr.bf16.mxu0 0
    %1063 = vmatpush1.bf16.msra.mxu0 %v909
    %1064 = vmatprep.subr.bf16.mxu0 0
    %1065 = vmatpush1.bf16.msra.mxu0 %v906
    %1066 = vmatprep.subr.bf16.mxu0 0
    %1067 = vmatpush1.bf16.msra.mxu0 %v903
    %1068 = vmatprep.subr.bf16.mxu0 0
    %1069 = vmatpush1.bf16.msra.mxu0 %v900
    %1070 = vmatprep.subr.bf16.mxu0 0
    %1071 = vmatpush1.bf16.msra.mxu0 %v897
    %1072 = vmatprep.subr.bf16.mxu0 0
    %1073 = vmatpush2.bf16.msra.mxu0 0
    %1074 = vmatprep.subr.bf16.mxu0 0
    %1075 = vmatpush2.bf16.msra.mxu0 0
    %1076 = vmatprep.subr.bf16.mxu0 0
    %1077 = vmatpush2.bf16.msra.mxu0 0
    %1078 = vmatprep.subr.bf16.mxu0 0
    %1079 = vmatpush2.bf16.msra.mxu0 0
    %1080 = vmatprep.subr.bf16.mxu0 0
    %1081 = vmatpush2.bf16.msra.mxu0 0
    %1082 = vmatprep.subr.bf16.mxu0 0
    %1083 = vmatpush2.bf16.msra.mxu0 0
    %1084 = vmatprep.subr.bf16.mxu0 0
    %1085 = vmatpush2.bf16.msra.mxu0 0
    %1086 = vmatprep.subr.bf16.mxu0 0
    %1087 = vmatpush2.bf16.msra.mxu0 0
    %1088 = vmatprep.mubr.bf16.mxu0 0
    %1089 = vmatmul.mubr.bf16.gmra.mxu0 %v775
    %v1090 = vpop.f32.mrf.mxu0
    %v1091 = vadd.f32 0.0, %v1090
    %v1092 = vpop.f32.mrf.mxu0
    %v1093 = vpop.f32.mrf.mxu0
    %v1094 = vadd.f32 0.0, %v1093
    %v1095 = vpop.f32.mrf.mxu0
    %1096 = vmatprep.mubr.bf16.mxu0 0
    %1097 = vmatmul.mubr.bf16.gmra.mxu0 %v776
    %v1098 = vpop.f32.mrf.mxu0
    %v1099 = vadd.f32 0.0, %v1098
    %v1100 = vpop.f32.mrf.mxu0
    %v1101 = vpop.f32.mrf.mxu0
    %v1102 = vadd.f32 0.0, %v1101
    %v1103 = vpop.f32.mrf.mxu0
    %1104 = vmatprep.mubr.bf16.mxu0 0
    %1105 = vmatmul.mubr.bf16.gmra.mxu0 %v777
    %v1106 = vpop.f32.mrf.mxu0
    %v1107 = vadd.f32 0.0, %v1106
    %v1108 = vpop.f32.mrf.mxu0
    %v1109 = vpop.f32.mrf.mxu0
    %v1110 = vadd.f32 0.0, %v1109
    %v1111 = vpop.f32.mrf.mxu0
    %1112 = vmatprep.mubr.bf16.mxu0 0
    %1113 = vmatmul.mubr.bf16.gmra.mxu0 %v778
    %v1114 = vpop.f32.mrf.mxu0
    %v1115 = vadd.f32 0.0, %v1114
    %v1116 = vpop.f32.mrf.mxu0
    %v1117 = vpop.f32.mrf.mxu0
    %v1118 = vadd.f32 0.0, %v1117
    %v1119 = vpop.f32.mrf.mxu0
    %1120 = vmatprep.mubr.bf16.mxu0 0
    %1121 = vmatmul.mubr.bf16.gmra.mxu0 %v779
    %v1122 = vpop.f32.mrf.mxu0
    %v1123 = vadd.f32 0.0, %v1122
    %v1124 = vpop.f32.mrf.mxu0
    %v1125 = vpop.f32.mrf.mxu0
    %v1126 = vadd.f32 0.0, %v1125
    %v1127 = vpop.f32.mrf.mxu0
    %1128 = vmatprep.mubr.bf16.mxu0 0
    %1129 = vmatmul.mubr.bf16.gmra.mxu0 %v780
    %v1130 = vpop.f32.mrf.mxu0
    %v1131 = vadd.f32 0.0, %v1130
    %v1132 = vpop.f32.mrf.mxu0
    %v1133 = vpop.f32.mrf.mxu0
    %v1134 = vadd.f32 0.0, %v1133
    %v1135 = vpop.f32.mrf.mxu0
    %1136 = vmatprep.mubr.bf16.mxu0 0
    %1137 = vmatmul.mubr.bf16.gmra.mxu0 %v781
    %v1138 = vpop.f32.mrf.mxu0
    %v1139 = vadd.f32 0.0, %v1138
    %v1140 = vpop.f32.mrf.mxu0
    %v1141 = vpop.f32.mrf.mxu0
    %v1142 = vadd.f32 0.0, %v1141
    %v1143 = vpop.f32.mrf.mxu0
    %1144 = vmatprep.mubr.bf16.mxu0 0
    %1145 = vmatmul.mubr.bf16.gmra.mxu0 %v782
    %v1146 = vpop.f32.mrf.mxu0
    %v1147 = vadd.f32 0.0, %v1146
    %v1148 = vpop.f32.mrf.mxu0
    %v1149 = vpop.f32.mrf.mxu0
    %v1150 = vadd.f32 0.0, %v1149
    %v1151 = vpop.f32.mrf.mxu0
    %1152 = vdwg.mxu0
    %v1153 = vlaneseq
    %v1154 = vshrl.u32 %v1153, 7
    %v1155 = vrot.slane %v978, 7
    %v1156 = vrot.slane %v982, 7
    %v1157 = vrot.slane %v988, 7
    %v1158 = vrot.slane %v992, 7
    %v1159 = vrot.slane %v998, 7
    %v1160 = vrot.slane %v1002, 7
    %v1161 = vrot.slane %v1008, 7
    %v1162 = vrot.slane %v1012, 7
    %v1163 = vrot.slane %v1018, 7
    %v1164 = vrot.slane %v1022, 7
    %v1165 = vrot.slane %v1028, 7
    %v1166 = vrot.slane %v1032, 7
    %v1167 = vrot.slane %v1038, 7
    %v1168 = vrot.slane %v1042, 7
    %v1169 = vrot.slane %v1048, 7
    %v1170 = vrot.slane %v1052, 7
    %vm1171 = vcmp.lt.s32.totalorder %v1154, 1
    %v1172 = vsel %vm1171, %v1169, %v1170
    %v1173 = vsel %vm1171, %v1168, %v1169
    %v1174 = vsel %vm1171, %v1167, %v1168
    %v1175 = vsel %vm1171, %v1166, %v1167
    %v1176 = vsel %vm1171, %v1165, %v1166
    %v1177 = vsel %vm1171, %v1164, %v1165
    %v1178 = vsel %vm1171, %v1163, %v1164
    %v1179 = vsel %vm1171, %v1162, %v1163
    %v1180 = vsel %vm1171, %v1161, %v1162
    %v1181 = vsel %vm1171, %v1160, %v1161
    %v1182 = vsel %vm1171, %v1159, %v1160
    %v1183 = vsel %vm1171, %v1158, %v1159
    %v1184 = vsel %vm1171, %v1157, %v1158
    %v1185 = vsel %vm1171, %v1156, %v1157
    %v1186 = vsel %vm1171, %v1155, %v1156
    %v1187 = vsel %vm1171, %v1170, %v1155
    %v1188 = vrot.slane %v1091, 1
    %v1189 = vrot.slane %v1094, 1
    %v1190 = vrot.slane %v1099, 1
    %v1191 = vrot.slane %v1102, 1
    %v1192 = vrot.slane %v1107, 1
    %v1193 = vrot.slane %v1110, 1
    %v1194 = vrot.slane %v1115, 1
    %v1195 = vrot.slane %v1118, 1
    %v1196 = vrot.slane %v1123, 1
    %v1197 = vrot.slane %v1126, 1
    %v1198 = vrot.slane %v1131, 1
    %v1199 = vrot.slane %v1134, 1
    %v1200 = vrot.slane %v1139, 1
    %v1201 = vrot.slane %v1142, 1
    %v1202 = vrot.slane %v1147, 1
    %v1203 = vrot.slane %v1150, 1
    %vm1204 = vcmp.lt.s32.totalorder %v1154, 7
    %v1205 = vsel %vm1204, %v1202, %v1203
    %v1206 = vsel %vm1204, %v1201, %v1202
    %v1207 = vsel %vm1204, %v1200, %v1201
    %v1208 = vsel %vm1204, %v1199, %v1200
    %v1209 = vsel %vm1204, %v1198, %v1199
    %v1210 = vsel %vm1204, %v1197, %v1198
    %v1211 = vsel %vm1204, %v1196, %v1197
    %v1212 = vsel %vm1204, %v1195, %v1196
    %v1213 = vsel %vm1204, %v1194, %v1195
    %v1214 = vsel %vm1204, %v1193, %v1194
    %v1215 = vsel %vm1204, %v1192, %v1193
    %v1216 = vsel %vm1204, %v1191, %v1192
    %v1217 = vsel %vm1204, %v1190, %v1191
    %v1218 = vsel %vm1204, %v1189, %v1190
    %v1219 = vsel %vm1204, %v1188, %v1189
    %v1220 = vsel %vm1204, %v1203, %v1188
    %vm1221 = vcmp.eq.s32.totalorder %v1154, 0
    %v1222 = vsel %vm1221, 0.0, %v1187
    %v1223 = vsel %vm1221, 0.0, %v1186
    %v1224 = vsel %vm1221, 0.0, %v1185
    %v1225 = vsel %vm1221, 0.0, %v1184
    %v1226 = vsel %vm1221, 0.0, %v1183
    %v1227 = vsel %vm1221, 0.0, %v1182
    %v1228 = vsel %vm1221, 0.0, %v1181
    %v1229 = vsel %vm1221, 0.0, %v1180
    %v1230 = vsel %vm1221, 0.0, %v1179
    %v1231 = vsel %vm1221, 0.0, %v1178
    %v1232 = vsel %vm1221, 0.0, %v1177
    %v1233 = vsel %vm1221, 0.0, %v1176
    %v1234 = vsel %vm1221, 0.0, %v1175
    %v1235 = vsel %vm1221, 0.0, %v1174
    %v1236 = vsel %vm1221, 0.0, %v1173
    %v1237 = vsel %vm1221, 0.0, %v1172
    %v1238 = vadd.f32 %v1222, %v980
    %v1239 = vadd.f32 %v1223, %v984
    %v1240 = vadd.f32 %v1224, %v990
    %v1241 = vadd.f32 %v1225, %v994
    %v1242 = vadd.f32 %v1226, %v1000
    %v1243 = vadd.f32 %v1227, %v1004
    %v1244 = vadd.f32 %v1228, %v1010
    %v1245 = vadd.f32 %v1229, %v1014
    %v1246 = vadd.f32 %v1230, %v1020
    %v1247 = vadd.f32 %v1231, %v1024
    %v1248 = vadd.f32 %v1232, %v1030
    %v1249 = vadd.f32 %v1233, %v1034
    %v1250 = vadd.f32 %v1234, %v1040
    %v1251 = vadd.f32 %v1235, %v1044
    %v1252 = vadd.f32 %v1236, %v1050
    %v1253 = vadd.f32 %v1237, %v1054
    %vm1254 = vcmp.eq.s32.totalorder %v1154, 7
    %v1255 = vsel %vm1254, 0.0, %v1219
    %v1256 = vsel %vm1254, 0.0, %v1218
    %v1257 = vsel %vm1254, 0.0, %v1217
    %v1258 = vsel %vm1254, 0.0, %v1216
    %v1259 = vsel %vm1254, 0.0, %v1215
    %v1260 = vsel %vm1254, 0.0, %v1214
    %v1261 = vsel %vm1254, 0.0, %v1213
    %v1262 = vsel %vm1254, 0.0, %v1212
    %v1263 = vsel %vm1254, 0.0, %v1211
    %v1264 = vsel %vm1254, 0.0, %v1210
    %v1265 = vsel %vm1254, 0.0, %v1209
    %v1266 = vsel %vm1254, 0.0, %v1208
    %v1267 = vsel %vm1254, 0.0, %v1207
    %v1268 = vsel %vm1254, 0.0, %v1206
    %v1269 = vsel %vm1254, 0.0, %v1205
    %v1270 = vsel %vm1254, 0.0, %v1220
    %v1271 = vadd.f32 %v1238, %v1255
    %v1272 = vadd.f32 %v1239, %v1256
    %v1273 = vadd.f32 %v1240, %v1257
    %v1274 = vadd.f32 %v1241, %v1258
    %v1275 = vadd.f32 %v1242, %v1259
    %v1276 = vadd.f32 %v1243, %v1260
    %v1277 = vadd.f32 %v1244, %v1261
    %v1278 = vadd.f32 %v1245, %v1262
    %v1279 = vadd.f32 %v1246, %v1263
    %v1280 = vadd.f32 %v1247, %v1264
    %v1281 = vadd.f32 %v1248, %v1265
    %v1282 = vadd.f32 %v1249, %v1266
    %v1283 = vadd.f32 %v1250, %v1267
    %v1284 = vadd.f32 %v1251, %v1268
    %v1285 = vadd.f32 %v1252, %v1269
    %v1286 = vadd.f32 %v1253, %v1270
    %v1287 = vld [vmem:[%s6] sm:$0x1]
    %v1289 = vlaneseq
    %v1290 = vshrl.u32 %v1289, 7
    %v1291 = vsub.s32 0, %v1290
    %v1292 = vrot.slane %v1287, %v1291
    %v1294 = vadd.f32 %v1271, %v1292
    %v1295 = vadd.f32 %v1272, %v1292
    %v1296 = vadd.f32 %v1273, %v1292
    %v1297 = vadd.f32 %v1274, %v1292
    %v1298 = vadd.f32 %v1275, %v1292
    %v1299 = vadd.f32 %v1276, %v1292
    %v1300 = vadd.f32 %v1277, %v1292
    %v1301 = vadd.f32 %v1278, %v1292
    %v1302 = vadd.f32 %v1279, %v1292
    %v1303 = vadd.f32 %v1280, %v1292
    %v1304 = vadd.f32 %v1281, %v1292
    %v1305 = vadd.f32 %v1282, %v1292
    %v1306 = vadd.f32 %v1283, %v1292
    %v1307 = vadd.f32 %v1284, %v1292
    %v1308 = vadd.f32 %v1285, %v1292
    %v1309 = vadd.f32 %v1286, %v1292
    %v1310 = vmax.f32 %v1294, 0.0
    %v1311 = vmax.f32 %v1295, 0.0
    %v1312 = vmax.f32 %v1296, 0.0
    %v1313 = vmax.f32 %v1297, 0.0
    %v1314 = vmax.f32 %v1298, 0.0
    %v1315 = vmax.f32 %v1299, 0.0
    %v1316 = vmax.f32 %v1300, 0.0
    %v1317 = vmax.f32 %v1301, 0.0
    %v1318 = vmax.f32 %v1302, 0.0
    %v1319 = vmax.f32 %v1303, 0.0
    %v1320 = vmax.f32 %v1304, 0.0
    %v1321 = vmax.f32 %v1305, 0.0
    %v1322 = vmax.f32 %v1306, 0.0
    %v1323 = vmax.f32 %v1307, 0.0
    %v1324 = vmax.f32 %v1308, 0.0
    %v1325 = vmax.f32 %v1309, 0.0
    %v1326 = vld [vmem:[%s0] sm:$0x1]
    %v1327 = vld [vmem:[%s0 + $0x1] sm:$0x1]
    %v1328 = vld [vmem:[%s0 + $0x2] sm:$0x1]
    %v1329 = vld [vmem:[%s0 + $0x3] sm:$0x1]
    %v1330 = vld [vmem:[%s0 + $0x4] sm:$0x1]
    %v1331 = vld [vmem:[%s0 + $0x5] sm:$0x1]
    %v1332 = vld [vmem:[%s0 + $0x6] sm:$0x1]
    %v1333 = vld [vmem:[%s0 + $0x7] sm:$0x1]
    %v1334 = vld [vmem:[%s0 + $0x8] sm:$0x1]
    %v1335 = vld [vmem:[%s0 + $0x9] sm:$0x1]
    %v1336 = vld [vmem:[%s0 + $0xa] sm:$0x1]
    %v1337 = vld [vmem:[%s0 + $0xb] sm:$0x1]
    %v1338 = vld [vmem:[%s0 + $0xc] sm:$0x1]
    %v1339 = vld [vmem:[%s0 + $0xd] sm:$0x1]
    %v1340 = vld [vmem:[%s0 + $0xe] sm:$0x1]
    %v1341 = vld [vmem:[%s0 + $0xf] sm:$0x1]
    %v1342 = vlaneseq
    %v1343 = vshrl.u32 %v1342, 7
    %v1344 = vsub.s32 0, %v1343
    %v1345 = vrot.slane %v1326, %v1344
    %v1346 = vlaneseq
    %v1347 = vshrl.u32 %v1346, 7
    %v1348 = vsub.s32 0, %v1347
    %v1349 = vrot.slane %v1327, %v1348
    %v1350 = vlaneseq
    %v1351 = vshrl.u32 %v1350, 7
    %v1352 = vsub.s32 0, %v1351
    %v1353 = vrot.slane %v1328, %v1352
    %v1354 = vlaneseq
    %v1355 = vshrl.u32 %v1354, 7
    %v1356 = vsub.s32 0, %v1355
    %v1357 = vrot.slane %v1329, %v1356
    %v1358 = vlaneseq
    %v1359 = vshrl.u32 %v1358, 7
    %v1360 = vsub.s32 0, %v1359
    %v1361 = vrot.slane %v1330, %v1360
    %v1362 = vlaneseq
    %v1363 = vshrl.u32 %v1362, 7
    %v1364 = vsub.s32 0, %v1363
    %v1365 = vrot.slane %v1331, %v1364
    %v1366 = vlaneseq
    %v1367 = vshrl.u32 %v1366, 7
    %v1368 = vsub.s32 0, %v1367
    %v1369 = vrot.slane %v1332, %v1368
    %v1370 = vlaneseq
    %v1371 = vshrl.u32 %v1370, 7
    %v1372 = vsub.s32 0, %v1371
    %v1373 = vrot.slane %v1333, %v1372
    %v1374 = vlaneseq
    %v1375 = vshrl.u32 %v1374, 7
    %v1376 = vsub.s32 0, %v1375
    %v1377 = vrot.slane %v1334, %v1376
    %v1378 = vlaneseq
    %v1379 = vshrl.u32 %v1378, 7
    %v1380 = vsub.s32 0, %v1379
    %v1381 = vrot.slane %v1335, %v1380
    %v1382 = vlaneseq
    %v1383 = vshrl.u32 %v1382, 7
    %v1384 = vsub.s32 0, %v1383
    %v1385 = vrot.slane %v1336, %v1384
    %v1386 = vlaneseq
    %v1387 = vshrl.u32 %v1386, 7
    %v1388 = vsub.s32 0, %v1387
    %v1389 = vrot.slane %v1337, %v1388
    %v1390 = vlaneseq
    %v1391 = vshrl.u32 %v1390, 7
    %v1392 = vsub.s32 0, %v1391
    %v1393 = vrot.slane %v1338, %v1392
    %v1394 = vlaneseq
    %v1395 = vshrl.u32 %v1394, 7
    %v1396 = vsub.s32 0, %v1395
    %v1397 = vrot.slane %v1339, %v1396
    %v1398 = vlaneseq
    %v1399 = vshrl.u32 %v1398, 7
    %v1400 = vsub.s32 0, %v1399
    %v1401 = vrot.slane %v1340, %v1400
    %v1402 = vlaneseq
    %v1403 = vshrl.u32 %v1402, 7
    %v1404 = vsub.s32 0, %v1403
    %v1405 = vrot.slane %v1341, %v1404
    %1406 = vset.pattern.permute.xlu0 0
    %1407 = vperm.xlu0 %1406, %v1345
    %v1408 = vpop.permute.xlu0 %1407
    %1409 = vset.pattern.permute.xlu0 0
    %1410 = vperm.xlu0 %1409, %v1349
    %v1411 = vpop.permute.xlu0 %1410
    %1412 = vset.pattern.permute.xlu0 0
    %1413 = vperm.xlu0 %1412, %v1353
    %v1414 = vpop.permute.xlu0 %1413
    %1415 = vset.pattern.permute.xlu0 0
    %1416 = vperm.xlu0 %1415, %v1357
    %v1417 = vpop.permute.xlu0 %1416
    %1418 = vset.pattern.permute.xlu0 0
    %1419 = vperm.xlu0 %1418, %v1361
    %v1420 = vpop.permute.xlu0 %1419
    %1421 = vset.pattern.permute.xlu0 0
    %1422 = vperm.xlu0 %1421, %v1365
    %v1423 = vpop.permute.xlu0 %1422
    %1424 = vset.pattern.permute.xlu0 0
    %1425 = vperm.xlu0 %1424, %v1369
    %v1426 = vpop.permute.xlu0 %1425
    %1427 = vset.pattern.permute.xlu0 0
    %1428 = vperm.xlu0 %1427, %v1373
    %v1429 = vpop.permute.xlu0 %1428
    %1430 = vset.pattern.permute.xlu0 0
    %1431 = vperm.xlu0 %1430, %v1377
    %v1432 = vpop.permute.xlu0 %1431
    %1433 = vset.pattern.permute.xlu0 0
    %1434 = vperm.xlu0 %1433, %v1381
    %v1435 = vpop.permute.xlu0 %1434
    %1436 = vset.pattern.permute.xlu0 0
    %1437 = vperm.xlu0 %1436, %v1385
    %v1438 = vpop.permute.xlu0 %1437
    %1439 = vset.pattern.permute.xlu0 0
    %1440 = vperm.xlu0 %1439, %v1389
    %v1441 = vpop.permute.xlu0 %1440
    %1442 = vset.pattern.permute.xlu0 0
    %1443 = vperm.xlu0 %1442, %v1393
    %v1444 = vpop.permute.xlu0 %1443
    %1445 = vset.pattern.permute.xlu0 0
    %1446 = vperm.xlu0 %1445, %v1397
    %v1447 = vpop.permute.xlu0 %1446
    %1448 = vset.pattern.permute.xlu0 0
    %1449 = vperm.xlu0 %1448, %v1401
    %v1450 = vpop.permute.xlu0 %1449
    %1451 = vset.pattern.permute.xlu0 0
    %1452 = vperm.xlu0 %1451, %v1405
    %v1453 = vpop.permute.xlu0 %1452
    %vm1454 = vcmp.lt.s32.totalorder %v1154, %v1408
    %vm1455 = vcmp.lt.s32.totalorder %v1154, %v1411
    %vm1456 = vcmp.lt.s32.totalorder %v1154, %v1414
    %vm1457 = vcmp.lt.s32.totalorder %v1154, %v1417
    %vm1458 = vcmp.lt.s32.totalorder %v1154, %v1420
    %vm1459 = vcmp.lt.s32.totalorder %v1154, %v1423
    %vm1460 = vcmp.lt.s32.totalorder %v1154, %v1426
    %vm1461 = vcmp.lt.s32.totalorder %v1154, %v1429
    %vm1462 = vcmp.lt.s32.totalorder %v1154, %v1432
    %vm1463 = vcmp.lt.s32.totalorder %v1154, %v1435
    %vm1464 = vcmp.lt.s32.totalorder %v1154, %v1438
    %vm1465 = vcmp.lt.s32.totalorder %v1154, %v1441
    %vm1466 = vcmp.lt.s32.totalorder %v1154, %v1444
    %vm1467 = vcmp.lt.s32.totalorder %v1154, %v1447
    %vm1468 = vcmp.lt.s32.totalorder %v1154, %v1450
    %vm1469 = vcmp.lt.s32.totalorder %v1154, %v1453
    %v1470 = vsel %vm1454, %v1310, 0.0
    %v1471 = vsel %vm1455, %v1311, 0.0
    %v1472 = vsel %vm1456, %v1312, 0.0
    %v1473 = vsel %vm1457, %v1313, 0.0
    %v1474 = vsel %vm1458, %v1314, 0.0
    %v1475 = vsel %vm1459, %v1315, 0.0
    %v1476 = vsel %vm1460, %v1316, 0.0
    %v1477 = vsel %vm1461, %v1317, 0.0
    %v1478 = vsel %vm1462, %v1318, 0.0
    %v1479 = vsel %vm1463, %v1319, 0.0
    %v1480 = vsel %vm1464, %v1320, 0.0
    %v1481 = vsel %vm1465, %v1321, 0.0
    %v1482 = vsel %vm1466, %v1322, 0.0
    %v1483 = vsel %vm1467, %v1323, 0.0
    %v1484 = vsel %vm1468, %v1324, 0.0
    %v1485 = vsel %vm1469, %v1325, 0.0
    %v1486 = vrot.slane %v1470, 4
    %v1487 = vmax.f32 %v1470, %v1486
    %v1488 = vrot.slane %v1487, 2
    %v1489 = vmax.f32 %v1487, %v1488
    %v1490 = vrot.slane %v1489, 1
    %v1491 = vmax.f32 %v1489, %v1490
    %v1492 = vrot.slane %v1471, 4
    %v1493 = vmax.f32 %v1471, %v1492
    %v1494 = vrot.slane %v1493, 2
    %v1495 = vmax.f32 %v1493, %v1494
    %v1496 = vrot.slane %v1495, 1
    %v1497 = vmax.f32 %v1495, %v1496
    %v1498 = vrot.slane %v1472, 4
    %v1499 = vmax.f32 %v1472, %v1498
    %v1500 = vrot.slane %v1499, 2
    %v1501 = vmax.f32 %v1499, %v1500
    %v1502 = vrot.slane %v1501, 1
    %v1503 = vmax.f32 %v1501, %v1502
    %v1504 = vrot.slane %v1473, 4
    %v1505 = vmax.f32 %v1473, %v1504
    %v1506 = vrot.slane %v1505, 2
    %v1507 = vmax.f32 %v1505, %v1506
    %v1508 = vrot.slane %v1507, 1
    %v1509 = vmax.f32 %v1507, %v1508
    %v1510 = vrot.slane %v1474, 4
    %v1511 = vmax.f32 %v1474, %v1510
    %v1512 = vrot.slane %v1511, 2
    %v1513 = vmax.f32 %v1511, %v1512
    %v1514 = vrot.slane %v1513, 1
    %v1515 = vmax.f32 %v1513, %v1514
    %v1516 = vrot.slane %v1475, 4
    %v1517 = vmax.f32 %v1475, %v1516
    %v1518 = vrot.slane %v1517, 2
    %v1519 = vmax.f32 %v1517, %v1518
    %v1520 = vrot.slane %v1519, 1
    %v1521 = vmax.f32 %v1519, %v1520
    %v1522 = vrot.slane %v1476, 4
    %v1523 = vmax.f32 %v1476, %v1522
    %v1524 = vrot.slane %v1523, 2
    %v1525 = vmax.f32 %v1523, %v1524
    %v1526 = vrot.slane %v1525, 1
    %v1527 = vmax.f32 %v1525, %v1526
    %v1528 = vrot.slane %v1477, 4
    %v1529 = vmax.f32 %v1477, %v1528
    %v1530 = vrot.slane %v1529, 2
    %v1531 = vmax.f32 %v1529, %v1530
    %v1532 = vrot.slane %v1531, 1
    %v1533 = vmax.f32 %v1531, %v1532
    %v1534 = vrot.slane %v1478, 4
    %v1535 = vmax.f32 %v1478, %v1534
    %v1536 = vrot.slane %v1535, 2
    %v1537 = vmax.f32 %v1535, %v1536
    %v1538 = vrot.slane %v1537, 1
    %v1539 = vmax.f32 %v1537, %v1538
    %v1540 = vrot.slane %v1479, 4
    %v1541 = vmax.f32 %v1479, %v1540
    %v1542 = vrot.slane %v1541, 2
    %v1543 = vmax.f32 %v1541, %v1542
    %v1544 = vrot.slane %v1543, 1
    %v1545 = vmax.f32 %v1543, %v1544
    %v1546 = vrot.slane %v1480, 4
    %v1547 = vmax.f32 %v1480, %v1546
    %v1548 = vrot.slane %v1547, 2
    %v1549 = vmax.f32 %v1547, %v1548
    %v1550 = vrot.slane %v1549, 1
    %v1551 = vmax.f32 %v1549, %v1550
    %v1552 = vrot.slane %v1481, 4
    %v1553 = vmax.f32 %v1481, %v1552
    %v1554 = vrot.slane %v1553, 2
    %v1555 = vmax.f32 %v1553, %v1554
    %v1556 = vrot.slane %v1555, 1
    %v1557 = vmax.f32 %v1555, %v1556
    %v1558 = vrot.slane %v1482, 4
    %v1559 = vmax.f32 %v1482, %v1558
    %v1560 = vrot.slane %v1559, 2
    %v1561 = vmax.f32 %v1559, %v1560
    %v1562 = vrot.slane %v1561, 1
    %v1563 = vmax.f32 %v1561, %v1562
    %v1564 = vrot.slane %v1483, 4
    %v1565 = vmax.f32 %v1483, %v1564
    %v1566 = vrot.slane %v1565, 2
    %v1567 = vmax.f32 %v1565, %v1566
    %v1568 = vrot.slane %v1567, 1
    %v1569 = vmax.f32 %v1567, %v1568
    %v1570 = vrot.slane %v1484, 4
    %v1571 = vmax.f32 %v1484, %v1570
    %v1572 = vrot.slane %v1571, 2
    %v1573 = vmax.f32 %v1571, %v1572
    %v1574 = vrot.slane %v1573, 1
    %v1575 = vmax.f32 %v1573, %v1574
    %v1576 = vrot.slane %v1485, 4
    %v1577 = vmax.f32 %v1485, %v1576
    %v1578 = vrot.slane %v1577, 2
    %v1579 = vmax.f32 %v1577, %v1578
    %v1580 = vrot.slane %v1579, 1
    %v1581 = vmax.f32 %v1579, %v1580
    %v1582 = vpack.c.bf16 %v1491, %v1491
    %v1583 = vpack.c.bf16 %v1497, %v1497
    %v1584 = vpack.c.bf16 %v1503, %v1503
    %v1585 = vpack.c.bf16 %v1509, %v1509
    %v1586 = vpack.c.bf16 %v1515, %v1515
    %v1587 = vpack.c.bf16 %v1521, %v1521
    %v1588 = vpack.c.bf16 %v1527, %v1527
    %v1589 = vpack.c.bf16 %v1533, %v1533
    %v1590 = vpack.c.bf16 %v1539, %v1539
    %v1591 = vpack.c.bf16 %v1545, %v1545
    %v1592 = vpack.c.bf16 %v1551, %v1551
    %v1593 = vpack.c.bf16 %v1557, %v1557
    %v1594 = vpack.c.bf16 %v1563, %v1563
    %v1595 = vpack.c.bf16 %v1569, %v1569
    %v1596 = vpack.c.bf16 %v1575, %v1575
    %v1597 = vpack.c.bf16 %v1581, %v1581
    %v1598 = vld [vmem:[#allocation10] sm:$0xf]
    %v1599 = vld [vmem:[#allocation10 + $0x4] sm:$0xf]
    %v1600 = vld [vmem:[#allocation10 + $0x8] sm:$0xf]
    %v1601 = vld [vmem:[#allocation10 + $0xc] sm:$0xf]
    %v1602 = vld [vmem:[#allocation10 + $0x10] sm:$0xf]
    %v1603 = vld [vmem:[#allocation10 + $0x14] sm:$0xf]
    %v1604 = vld [vmem:[#allocation10 + $0x18] sm:$0xf]
    %v1605 = vld [vmem:[#allocation10 + $0x1c] sm:$0xf]
    %v1606 = vld [vmem:[#allocation10 + $0x20] sm:$0xf]
    %v1607 = vld [vmem:[#allocation10 + $0x24] sm:$0xf]
    %v1608 = vld [vmem:[#allocation10 + $0x28] sm:$0xf]
    %v1609 = vld [vmem:[#allocation10 + $0x2c] sm:$0xf]
    %v1610 = vld [vmem:[#allocation10 + $0x30] sm:$0xf]
    %v1611 = vld [vmem:[#allocation10 + $0x34] sm:$0xf]
    %v1612 = vld [vmem:[#allocation10 + $0x38] sm:$0xf]
    %v1613 = vld [vmem:[#allocation10 + $0x3c] sm:$0xf]
    %v1614 = vld [vmem:[%s8] sm:$0x1]
    %v1616 = vlaneseq
    %v1617 = vshrl.u32 %v1616, 7
    %v1618 = vsub.s32 0, %v1617
    %v1619 = vrot.slane %v1614, %v1618
    %v1637 = vunpack.c.l.b16 %v1582
    %v1638 = vunpack.c.l.b16 %v1583
    %v1639 = vunpack.c.l.b16 %v1584
    %v1640 = vunpack.c.l.b16 %v1585
    %v1641 = vunpack.c.l.b16 %v1586
    %v1642 = vunpack.c.l.b16 %v1587
    %v1643 = vunpack.c.l.b16 %v1588
    %v1644 = vunpack.c.l.b16 %v1589
    %v1645 = vunpack.c.l.b16 %v1590
    %v1646 = vunpack.c.l.b16 %v1591
    %v1647 = vunpack.c.l.b16 %v1592
    %v1648 = vunpack.c.l.b16 %v1593
    %v1649 = vunpack.c.l.b16 %v1594
    %v1650 = vunpack.c.l.b16 %v1595
    %v1651 = vunpack.c.l.b16 %v1596
    %v1652 = vunpack.c.l.b16 %v1597
    %vm1653 = vcmask 1041409
    %v1654 = vsel %vm1653, %v1638, %v1637
    %vm1655 = vcmask 1042434
    %v1656 = vsel %vm1655, %v1639, %v1654
    %vm1657 = vcmask 1043459
    %v1658 = vsel %vm1657, %v1640, %v1656
    %vm1659 = vcmask 1044484
    %v1660 = vsel %vm1659, %v1641, %v1658
    %vm1661 = vcmask 1045509
    %v1662 = vsel %vm1661, %v1642, %v1660
    %vm1663 = vcmask 1046534
    %v1664 = vsel %vm1663, %v1643, %v1662
    %vm1665 = vcmask 1047559
    %v1666 = vsel %vm1665, %v1644, %v1664
    %v1667 = vsel %vm1653, %v1646, %v1645
    %v1668 = vsel %vm1655, %v1647, %v1667
    %v1669 = vsel %vm1657, %v1648, %v1668
    %v1670 = vsel %vm1659, %v1649, %v1669
    %v1671 = vsel %vm1661, %v1650, %v1670
    %v1672 = vsel %vm1663, %v1651, %v1671
    %v1673 = vsel %vm1665, %v1652, %v1672
    %v1674 = vpack.c.b16 %v1673, %v1666
    %v1692 = vunpack.c.l.b16 %v1598
    %v1693 = vunpack.c.l.b16 %v1599
    %v1694 = vunpack.c.l.b16 %v1600
    %v1695 = vunpack.c.l.b16 %v1601
    %v1696 = vunpack.c.l.b16 %v1602
    %v1697 = vunpack.c.l.b16 %v1603
    %v1698 = vunpack.c.l.b16 %v1604
    %v1699 = vunpack.c.l.b16 %v1605
    %v1700 = vunpack.c.l.b16 %v1606
    %v1701 = vunpack.c.l.b16 %v1607
    %v1702 = vunpack.c.l.b16 %v1608
    %v1703 = vunpack.c.l.b16 %v1609
    %v1704 = vunpack.c.l.b16 %v1610
    %v1705 = vunpack.c.l.b16 %v1611
    %v1706 = vunpack.c.l.b16 %v1612
    %v1707 = vunpack.c.l.b16 %v1613
    %v1708 = vpack.c.b16 %v1693, %v1692
    %v1709 = vpack.c.b16 %v1695, %v1694
    %v1710 = vpack.c.b16 %v1697, %v1696
    %v1711 = vpack.c.b16 %v1699, %v1698
    %v1712 = vpack.c.b16 %v1701, %v1700
    %v1713 = vpack.c.b16 %v1703, %v1702
    %v1714 = vpack.c.b16 %v1705, %v1704
    %v1715 = vpack.c.b16 %v1707, %v1706
    %1724 = vmatprep.subr.bf16.mxu0 0
    %1725 = vmatpush1.bf16.msra.mxu0 %v1715
    %1726 = vmatprep.subr.bf16.mxu0 0
    %1727 = vmatpush1.bf16.msra.mxu0 %v1714
    %1728 = vmatprep.subr.bf16.mxu0 0
    %1729 = vmatpush1.bf16.msra.mxu0 %v1713
    %1730 = vmatprep.subr.bf16.mxu0 0
    %1731 = vmatpush1.bf16.msra.mxu0 %v1712
    %1732 = vmatprep.subr.bf16.mxu0 0
    %1733 = vmatpush1.bf16.msra.mxu0 %v1711
    %1734 = vmatprep.subr.bf16.mxu0 0
    %1735 = vmatpush1.bf16.msra.mxu0 %v1710
    %1736 = vmatprep.subr.bf16.mxu0 0
    %1737 = vmatpush1.bf16.msra.mxu0 %v1709
    %1738 = vmatprep.subr.bf16.mxu0 0
    %1739 = vmatpush1.bf16.msra.mxu0 %v1708
    %1740 = vmatprep.subr.bf16.mxu0 0
    %1741 = vmatpush2.bf16.msra.mxu0 0
    %1742 = vmatprep.subr.bf16.mxu0 0
    %1743 = vmatpush2.bf16.msra.mxu0 0
    %1744 = vmatprep.subr.bf16.mxu0 0
    %1745 = vmatpush2.bf16.msra.mxu0 0
    %1746 = vmatprep.subr.bf16.mxu0 0
    %1747 = vmatpush2.bf16.msra.mxu0 0
    %1748 = vmatprep.subr.bf16.mxu0 0
    %1749 = vmatpush2.bf16.msra.mxu0 0
    %1750 = vmatprep.subr.bf16.mxu0 0
    %1751 = vmatpush2.bf16.msra.mxu0 0
    %1752 = vmatprep.subr.bf16.mxu0 0
    %1753 = vmatpush2.bf16.msra.mxu0 0
    %1754 = vmatprep.subr.bf16.mxu0 0
    %1755 = vmatpush2.bf16.msra.mxu0 0
    %1756 = vmatprep.mubr.bf16.mxu0 0
    %1757 = vmatmul.mubr.bf16.gmra.mxu0 %v1674
    %v1758 = vpop.f32.mrf.mxu0
    %v1759 = vadd.f32 %v1619, %v1758
    %v1760 = vpop.f32.mrf.mxu0
    %v1761 = vpop.f32.mrf.mxu0
    %v1762 = vadd.f32 %v1619, %v1761
    %v1763 = vpop.f32.mrf.mxu0
    %1764 = vdwg.mxu0
    %v1765 = vmax.f32 %v1759, 0.0
    %v1766 = vmax.f32 %v1762, 0.0
    %1767 = vst [vmem:[#allocation12] sm:$0xff] %v1765
    %1768 = vst [vmem:[#allocation12 + $0x8] sm:$0xff] %v1766
    // Predicated region
    $region58: #{tpu_custom_call.1} parent=1 // pred_check
      _
    $region59: #{tpu_custom_call.1} parent=1 // pred_check_branch
      %1770 = sbr.rel (0) target = $region61
    $region60: #{tpu_custom_call.1} parent=1 // pred_region
      %s1772 = ssub.s32 2048, 2048
      %1773 = vsyncadd [#allocation4], %s1772
      %s1774 = sshll.u32 [#allocation11], 4
      %s1775 = int_to_ptr.vmem [resolvable:$true] %s1774
      %1780 = dma.vmem_to_hbm [thread:$0]  %s1775, 2048, %s9, [#allocation4], 128, 128, 8
    $region61: #{tpu_custom_call.1} parent=1 // pred_fallthru
      _
    // Predicated region
    $region62: #{tpu_custom_call.1} parent=1 // pred_check
      _
    $region63: #{tpu_custom_call.1} parent=1 // pred_check_branch
      %1782 = sbr.rel (0) target = $region65
    $region64: #{tpu_custom_call.1} parent=1 // pred_region
      %s1784 = ssub.s32 256, 256
      %1785 = vsyncadd [#allocation13], %s1784
      %s1786 = sshll.u32 [#allocation12], 4
      %s1787 = int_to_ptr.vmem [resolvable:$true] %s1786
      %1792 = dma.vmem_to_hbm [thread:$0]  %s1787, 256, %s10, [#allocation13], 128, 128, 8
    $region65: #{tpu_custom_call.1} parent=1 // pred_fallthru
      _
    // Predicated region
    $region66: #{tpu_custom_call.1} parent=1 // pred_check
      _
    $region67: #{tpu_custom_call.1} parent=1 // pred_check_branch
      %1794 = sbr.rel (0) target = $region69
    $region68: #{tpu_custom_call.1} parent=1 // pred_region
      %1795 = dma.done [#allocation4], 2048
    $region69: #{tpu_custom_call.1} parent=1 // pred_fallthru
      _
    // Predicated region
    $region70: #{tpu_custom_call.1} parent=1 // pred_check
      _
    $region71: #{tpu_custom_call.1} parent=1 // pred_check_branch
      %1797 = sbr.rel (0) target = $region73
    $region72: #{tpu_custom_call.1} parent=1 // pred_region
      %1798 = dma.done [#allocation13], 256
    $region73: #{tpu_custom_call.1} parent=1 // pred_fallthru
      _
    %1799 = vsyncpa [#allocation3], 1
    %1800 = vsyncpa [#allocation6], 1
    %1801 = vsyncpa [#allocation9], 1
    %1802 = vsyncpa [#allocation4], 1
    %1803 = vsyncpa [#allocation13], 1

</llo_original>
